<compile_context>
chip_gen: v7x
topology: tpu7x:2x2x1
jax: 0.10.0
libtpu: 0.0.40
codegen_flags: <defaults>
</compile_context>

<pallas_src>
import functools

import jax
import jax.numpy as jnp
import numpy as np
from jax.experimental import pallas as pl
from jax.experimental.pallas import tpu as pltpu


def _vmem_limit_bytes() -> int:
    """Scoped-VMEM budget: generous on v5e/v6e (128 MiB physical), conservative
    fallback when the capacity cannot be queried (covers v7x's 64 MiB/TC)."""
    try:
        info = pltpu.get_tpu_info()
        cap = getattr(info, "vmem_capacity_bytes", None)
    except Exception:
        cap = None
    if not cap:
        return 32 * 1024 * 1024
    return int(min(100 * 1024 * 1024, (int(cap) * 3) // 4))


def _conv2d_kernel(x_ref, w_ref, b_ref, o_ref, *scratch,
                   kh, kw, pad_h, pad_w, fold_k):
    """One grid step = one batch element, full spatial extent.

    x_ref : (1, H, W, Ci)        input image (NHWC block)
    w_ref : (KH*KW*Ci, Co)       folded weights, row index = (i*KW + j)*Ci + ci
    b_ref : (1, Co) float32      bias (zeros if the conv has no bias)
    o_ref : (1, Co, Ho*Wo)       output, channel-major & lane-dense (Ho*Wo lanes)
    scratch (optional, in order):
        xpad_ref  : (H+2p, W+2p, Ci)      only when padding > 0
        patch_ref : (Ho, Wo, KH*KW*Ci)    only when fold_k (im2col patch buffer)
    """
    _, h, w, ci = x_ref.shape
    k_total, co = w_ref.shape
    h_out = h + 2 * pad_h - kh + 1
    w_out = w + 2 * pad_w - kw + 1

    rest = list(scratch)
    xpad_ref = rest.pop(0) if (pad_h > 0 or pad_w > 0) else None
    patch_ref = rest.pop(0) if fold_k else None

    if xpad_ref is not None:
        hpad, wpad, _ = xpad_ref.shape
        # Zero ONLY the border strips -- the interior is fully overwritten just
        # below (removes a full O(Hpad*Wpad) masked-store pass per image).
        # Not gated on program_id == 0: megacore cores have separate scratch.
        if pad_h > 0:
            zrow = jnp.zeros((pad_h, wpad, ci), dtype=xpad_ref.dtype)
            xpad_ref[:pad_h, :, :] = zrow
            xpad_ref[hpad - pad_h:, :, :] = zrow
        if pad_w > 0:
            zcol = jnp.zeros((hpad, pad_w, ci), dtype=xpad_ref.dtype)
            xpad_ref[:, :pad_w, :] = zcol
            xpad_ref[:, wpad - pad_w:, :] = zcol
        xpad_ref[pad_h:pad_h + h, pad_w:pad_w + w, :] = x_ref[0]

        def tap(i, j):
            return xpad_ref[i:i + h_out, j:j + w_out, :]
    else:
        # padding == 0: bypass the scratch entirely and slice the input block.
        x_img = x_ref[0]

        def tap(i, j):
            return x_img[i:i + h_out, j:j + w_out, :]

    taps = [(i, j) for i in range(kh) for j in range(kw)]

    if fold_k:
        # K-folded im2col: one (Ho*Wo, KH*KW*Ci) @ (KH*KW*Ci, Co) MXU matmul
        # instead of KH*KW shallow K=Ci matmuls (9x deeper contraction).
        for t, (i, j) in enumerate(taps):
            patch_ref[:, :, t * ci:(t + 1) * ci] = tap(i, j)
        # NOTE: this reshape keeps the minor dim, relayout-free when Wo % 8 == 0.
        patches = patch_ref[...].reshape(h_out * w_out, k_total)
        acc = jnp.dot(patches, w_ref[...], preferred_element_type=jnp.float32)
    else:
        # Wide channels: Ci alone fills the MXU contraction; skip the patch buffer.
        acc = jnp.zeros((h_out * w_out, co), jnp.float32)
        for t, (i, j) in enumerate(taps):
            p = tap(i, j).reshape(h_out * w_out, ci)
            acc = acc + jnp.dot(p, w_ref[t * ci:(t + 1) * ci, :],
                                preferred_element_type=jnp.float32)

    acc = acc + b_ref[...]  # bias stays f32 until after accumulation
    # One transpose (XLU slot) so the store is lane-dense: the minor dim is
    # Ho*Wo (>=128) instead of Co (tiny for cellseg-style layers -> masked vst).
    o_ref[0] = acc.T.astype(o_ref.dtype)


def _conv2d_nchw(x_nchw: jax.Array, weight_oihw: jax.Array, bias, padding: int) -> jax.Array:
    n, ci, h, w = x_nchw.shape
    co, ci_w, kh, kw = weight_oihw.shape
    if ci_w != ci:
        raise ValueError(f"Channel mismatch: input has {ci}, weight expects {ci_w}.")
    pad = int(padding)
    h_out = h + 2 * pad - kh + 1
    w_out = w + 2 * pad - kw + 1
    if h_out <= 0 or w_out <= 0:
        raise ValueError("Output spatial size must be positive.")

    # Fold the KH*KW taps into the matmul contraction when Ci alone would
    # under-fill the 128/256-deep MXU.
    fold_k = ci < 128

    x_nhwc = jnp.transpose(x_nchw, (0, 2, 3, 1))                       # channels minormost
    w_fold = jnp.transpose(weight_oihw, (2, 3, 1, 0)).reshape(kh * kw * ci, co)
    w_fold = w_fold.astype(x_nchw.dtype)
    if bias is None:
        b2d = jnp.zeros((1, co), dtype=jnp.float32)
    else:
        b2d = bias.reshape(1, co).astype(jnp.float32)

    scratch_shapes = []
    if pad > 0:
        scratch_shapes.append(pltpu.VMEM((h + 2 * pad, w + 2 * pad, ci), x_nchw.dtype))
    if fold_k:
        scratch_shapes.append(pltpu.VMEM((h_out, w_out, kh * kw * ci), x_nchw.dtype))

    kernel = functools.partial(_conv2d_kernel, kh=kh, kw=kw,
                               pad_h=pad, pad_w=pad, fold_k=fold_k)
    # TODO(synk): tile H (with a kh-1 halo) as a second 'parallel' grid axis so
    # large segmentation images fit v7x's 64 MiB VMEM and feed both TensorCores.
    y = pl.pallas_call(
        kernel,
        out_shape=jax.ShapeDtypeStruct((n, co, h_out * w_out), x_nchw.dtype),
        grid=(n,),
        in_specs=[
            pl.BlockSpec((1, h, w, ci), lambda ni: (ni, 0, 0, 0)),
            pl.BlockSpec((kh * kw * ci, co), lambda ni: (0, 0)),
            pl.BlockSpec((1, co), lambda ni: (0, 0)),
        ],
        out_specs=pl.BlockSpec((1, co, h_out * w_out), lambda ni: (ni, 0, 0)),
        scratch_shapes=scratch_shapes,
        compiler_params=pltpu.CompilerParams(
            dimension_semantics=("parallel",),
            vmem_limit_bytes=_vmem_limit_bytes(),
        ),
    )(x_nhwc, w_fold, b2d)
    # (N, Co, Ho*Wo) -> NCHW is a free reshape (no output transpose pass).
    return y.reshape(n, co, h_out, w_out)


def _standardize_weight(w_oihw: jax.Array, eps: float) -> jax.Array:
    """WSConv2d: per-out-channel (w - mean) / sqrt(var + eps), biased variance,
    computed in f32 (matches F.batch_norm(training=True, eps=eps) semantics)."""
    w32 = w_oihw.astype(jnp.float32)
    mean = jnp.mean(w32, axis=(1, 2, 3), keepdims=True)
    var = jnp.var(w32, axis=(1, 2, 3), keepdims=True)
    return ((w32 - mean) * jax.lax.rsqrt(var + eps)).astype(w_oihw.dtype)


_ALLOWED = ("conv", "wsconv")


def conv_forward(x_nchw: jax.Array, weight_oihw: jax.Array, bias=None, *,
                 name: str = "conv", padding: int = 1, stride: int = 1,
                 dilation: int = 1, groups: int = 1, eps: float = 1e-7) -> jax.Array:
    """Forward pass of Conv(name=...)(x).  NCHW in / NCHW out, like PyTorch."""
    if name not in _ALLOWED:
        raise ValueError(
            f"Illegal convolution method given. Allowed: {list(_ALLOWED)}. Got: '{name}'")
    # TODO(synk): 'scaled_wsconv' (gain + fan-in scaled weight standardization)
    # and stride/dilation/groups != 1 are not implemented in this kernel.
    if stride != 1 or dilation != 1 or groups != 1:
        raise NotImplementedError("Only stride=1, dilation=1, groups=1 are supported.")
    w = weight_oihw
    if name == "wsconv":
        w = _standardize_weight(w, eps)
    return _conv2d_nchw(x_nchw, w, bias, padding)


if __name__ == "__main__":
    key = jax.random.PRNGKey(0)
    kx, kw_key, kb, kx2, kw2, kb2 = jax.random.split(key, 6)

    def conv_ref(xx, ww, bb, padding):
        out = jax.lax.conv_general_dilated(
            xx, ww, window_strides=(1, 1),
            padding=((padding, padding), (padding, padding)),
            dimension_numbers=("NCHW", "OIHW", "NCHW"),
            precision=jax.lax.Precision.HIGHEST)
        if bb is not None:
            out = out + bb[None, :, None, None]
        return out

    # ---- small-channel layer (K-folded im2col path), module-style shapes ----
    x = jax.random.normal(kx, (2, 4, 16, 16), dtype=jnp.float32)
    weight = 0.1 * jax.random.normal(kw_key, (8, 4, 3, 3), dtype=jnp.float32)
    bias = jax.random.normal(kb, (8,), dtype=jnp.float32)

    # name='conv' -> nn.Conv2d
    y = jax.block_until_ready(conv_forward(x, weight, bias, name="conv", padding=1))
    assert y.shape == (2, 8, 16, 16), y.shape
    assert y.dtype == x.dtype
    np.testing.assert_allclose(np.asarray(y), np.asarray(conv_ref(x, weight, bias, 1)),
                               rtol=5e-4, atol=5e-4)

    # name='wsconv' -> WSConv2d (weight standardization, then the same conv)
    y_ws = jax.block_until_ready(conv_forward(x, weight, bias, name="wsconv", padding=1))
    np.testing.assert_allclose(
        np.asarray(y_ws),
        np.asarray(conv_ref(x, _standardize_weight(weight, 1e-7), bias, 1)),
        rtol=5e-4, atol=5e-4)

    # padding=0, no bias (exercises the scratch-bypass branch)
    y0 = jax.block_until_ready(conv_forward(x, weight, None, name="conv", padding=0))
    assert y0.shape == (2, 8, 14, 14), y0.shape
    np.testing.assert_allclose(np.asarray(y0), np.asarray(conv_ref(x, weight, None, 0)),
                               rtol=5e-4, atol=5e-4)

    # ---- wide-channel layer (per-tap path, Ci fills the MXU contraction) ----
    x2 = jax.random.normal(kx2, (1, 128, 16, 16), dtype=jnp.float32)
    weight2 = 0.03 * jax.random.normal(kw2, (128, 128, 3, 3), dtype=jnp.float32)
    bias2 = jax.random.normal(kb2, (128,), dtype=jnp.float32)
    y2 = jax.block_until_ready(conv_forward(x2, weight2, bias2, name="conv", padding=1))
    assert y2.shape == (1, 128, 16, 16), y2.shape
    np.testing.assert_allclose(np.asarray(y2), np.asarray(conv_ref(x2, weight2, bias2, 1)),
                               rtol=2e-3, atol=2e-3)

    print("KERNEL_OK")
</pallas_src>

<mosaic_0001>
module attributes {stable_mosaic.version = 11 : i64} {
  func.func @_conv2d_kernel(%arg0: i32, %arg1: memref<1x16x16x4xf32, #tpu.memory_space<vmem>>, %arg2: memref<36x8xf32, #tpu.memory_space<vmem>>, %arg3: memref<1x8xf32, #tpu.memory_space<vmem>>, %arg4: memref<1x8x256xf32, #tpu.memory_space<vmem>>, %arg5: memref<18x18x4xf32, #tpu.memory_space<vmem>>, %arg6: memref<16x16x36xf32, #tpu.memory_space<vmem>>) attributes {dimension_semantics = [#tpu.dimension_semantics<parallel>], iteration_bounds = array<i64: 2>, scalar_prefetch = 0 : i64, scratch_operands = 2 : i64, tpu.core_type = #tpu.core_type<tc>, window_params = [{transform_indices = @transform_0, window_bounds = array<i64: 1, 16, 16, 4>}, {pipeline_mode = #tpu.pipeline_mode<synchronous>, transform_indices = @transform_1, window_bounds = array<i64: 36, 8>}, {pipeline_mode = #tpu.pipeline_mode<synchronous>, transform_indices = @transform_2, window_bounds = array<i64: 1, 8>}, {transform_indices = @transform_3, window_bounds = array<i64: 1, 8, 256>}]} {
    %cst = arith.constant 0.000000e+00 : f32
    %0 = vector.broadcast %cst : f32 to vector<1x18x4xf32>
    %c0 = arith.constant 0 : index
    %c0_0 = arith.constant 0 : index
    %c0_1 = arith.constant 0 : index
    %1 = vector.load %arg5[%c0, %c0_0, %c0_1] : memref<18x18x4xf32, #tpu.memory_space<vmem>>, vector<1x18x4xf32>
    tpu.vector_store %arg5[%c0, %c0_0, %c0_1], %0 {strides = array<i32>} : memref<18x18x4xf32, #tpu.memory_space<vmem>>, vector<1x18x4xf32>,
    %c17 = arith.constant 17 : index
    %c0_2 = arith.constant 0 : index
    %c0_3 = arith.constant 0 : index
    %2 = vector.load %arg5[%c17, %c0_2, %c0_3] : memref<18x18x4xf32, #tpu.memory_space<vmem>>, vector<1x18x4xf32>
    tpu.vector_store %arg5[%c17, %c0_2, %c0_3], %0 {strides = array<i32>} : memref<18x18x4xf32, #tpu.memory_space<vmem>>, vector<1x18x4xf32>,
    %cst_4 = arith.constant 0.000000e+00 : f32
    %3 = vector.broadcast %cst_4 : f32 to vector<18x1x4xf32>
    %c0_5 = arith.constant 0 : index
    %c0_6 = arith.constant 0 : index
    %c0_7 = arith.constant 0 : index
    %4 = vector.load %arg5[%c0_5, %c0_6, %c0_7] : memref<18x18x4xf32, #tpu.memory_space<vmem>>, vector<18x1x4xf32>
    tpu.vector_store %arg5[%c0_5, %c0_6, %c0_7], %3 {strides = array<i32>} : memref<18x18x4xf32, #tpu.memory_space<vmem>>, vector<18x1x4xf32>,
    %c0_8 = arith.constant 0 : index
    %c17_9 = arith.constant 17 : index
    %c0_10 = arith.constant 0 : index
    %5 = vector.load %arg5[%c0_8, %c17_9, %c0_10] : memref<18x18x4xf32, #tpu.memory_space<vmem>>, vector<18x1x4xf32>
    tpu.vector_store %arg5[%c0_8, %c17_9, %c0_10], %3 {strides = array<i32>} : memref<18x18x4xf32, #tpu.memory_space<vmem>>, vector<18x1x4xf32>,
    %c0_11 = arith.constant 0 : index
    %c0_12 = arith.constant 0 : index
    %c0_13 = arith.constant 0 : index
    %c0_14 = arith.constant 0 : index
    %6 = vector.load %arg1[%c0_11, %c0_12, %c0_13, %c0_14] : memref<1x16x16x4xf32, #tpu.memory_space<vmem>>, vector<1x16x16x4xf32>
    %7 = vector.shape_cast %6 : vector<1x16x16x4xf32> to vector<16x16x4xf32>
    %c1 = arith.constant 1 : index
    %c1_15 = arith.constant 1 : index
    %c0_16 = arith.constant 0 : index
    %8 = vector.load %arg5[%c1, %c1_15, %c0_16] : memref<18x18x4xf32, #tpu.memory_space<vmem>>, vector<16x16x4xf32>
    tpu.vector_store %arg5[%c1, %c1_15, %c0_16], %7 {strides = array<i32>} : memref<18x18x4xf32, #tpu.memory_space<vmem>>, vector<16x16x4xf32>,
    %c0_17 = arith.constant 0 : index
    %c0_18 = arith.constant 0 : index
    %c0_19 = arith.constant 0 : index
    %9 = vector.load %arg5[%c0_17, %c0_18, %c0_19] : memref<18x18x4xf32, #tpu.memory_space<vmem>>, vector<16x16x4xf32>
    %c0_20 = arith.constant 0 : index
    %c0_21 = arith.constant 0 : index
    %c0_22 = arith.constant 0 : index
    %10 = vector.load %arg6[%c0_20, %c0_21, %c0_22] : memref<16x16x36xf32, #tpu.memory_space<vmem>>, vector<16x16x4xf32>
    tpu.vector_store %arg6[%c0_20, %c0_21, %c0_22], %9 {strides = array<i32>} : memref<16x16x36xf32, #tpu.memory_space<vmem>>, vector<16x16x4xf32>,
    %c0_23 = arith.constant 0 : index
    %c1_24 = arith.constant 1 : index
    %c0_25 = arith.constant 0 : index
    %11 = vector.load %arg5[%c0_23, %c1_24, %c0_25] : memref<18x18x4xf32, #tpu.memory_space<vmem>>, vector<16x16x4xf32>
    %c0_26 = arith.constant 0 : index
    %c0_27 = arith.constant 0 : index
    %c4 = arith.constant 4 : index
    %12 = vector.load %arg6[%c0_26, %c0_27, %c4] : memref<16x16x36xf32, #tpu.memory_space<vmem>>, vector<16x16x4xf32>
    tpu.vector_store %arg6[%c0_26, %c0_27, %c4], %11 {strides = array<i32>} : memref<16x16x36xf32, #tpu.memory_space<vmem>>, vector<16x16x4xf32>,
    %c0_28 = arith.constant 0 : index
    %c2 = arith.constant 2 : index
    %c0_29 = arith.constant 0 : index
    %13 = vector.load %arg5[%c0_28, %c2, %c0_29] : memref<18x18x4xf32, #tpu.memory_space<vmem>>, vector<16x16x4xf32>
    %c0_30 = arith.constant 0 : index
    %c0_31 = arith.constant 0 : index
    %c8 = arith.constant 8 : index
    %14 = vector.load %arg6[%c0_30, %c0_31, %c8] : memref<16x16x36xf32, #tpu.memory_space<vmem>>, vector<16x16x4xf32>
    tpu.vector_store %arg6[%c0_30, %c0_31, %c8], %13 {strides = array<i32>} : memref<16x16x36xf32, #tpu.memory_space<vmem>>, vector<16x16x4xf32>,
    %c1_32 = arith.constant 1 : index
    %c0_33 = arith.constant 0 : index
    %c0_34 = arith.constant 0 : index
    %15 = vector.load %arg5[%c1_32, %c0_33, %c0_34] : memref<18x18x4xf32, #tpu.memory_space<vmem>>, vector<16x16x4xf32>
    %c0_35 = arith.constant 0 : index
    %c0_36 = arith.constant 0 : index
    %c12 = arith.constant 12 : index
    %16 = vector.load %arg6[%c0_35, %c0_36, %c12] : memref<16x16x36xf32, #tpu.memory_space<vmem>>, vector<16x16x4xf32>
    tpu.vector_store %arg6[%c0_35, %c0_36, %c12], %15 {strides = array<i32>} : memref<16x16x36xf32, #tpu.memory_space<vmem>>, vector<16x16x4xf32>,
    %c1_37 = arith.constant 1 : index
    %c1_38 = arith.constant 1 : index
    %c0_39 = arith.constant 0 : index
    %17 = vector.load %arg5[%c1_37, %c1_38, %c0_39] : memref<18x18x4xf32, #tpu.memory_space<vmem>>, vector<16x16x4xf32>
    %c0_40 = arith.constant 0 : index
    %c0_41 = arith.constant 0 : index
    %c16 = arith.constant 16 : index
    %18 = vector.load %arg6[%c0_40, %c0_41, %c16] : memref<16x16x36xf32, #tpu.memory_space<vmem>>, vector<16x16x4xf32>
    tpu.vector_store %arg6[%c0_40, %c0_41, %c16], %17 {strides = array<i32>} : memref<16x16x36xf32, #tpu.memory_space<vmem>>, vector<16x16x4xf32>,
    %c1_42 = arith.constant 1 : index
    %c2_43 = arith.constant 2 : index
    %c0_44 = arith.constant 0 : index
    %19 = vector.load %arg5[%c1_42, %c2_43, %c0_44] : memref<18x18x4xf32, #tpu.memory_space<vmem>>, vector<16x16x4xf32>
    %c0_45 = arith.constant 0 : index
    %c0_46 = arith.constant 0 : index
    %c20 = arith.constant 20 : index
    %20 = vector.load %arg6[%c0_45, %c0_46, %c20] : memref<16x16x36xf32, #tpu.memory_space<vmem>>, vector<16x16x4xf32>
    tpu.vector_store %arg6[%c0_45, %c0_46, %c20], %19 {strides = array<i32>} : memref<16x16x36xf32, #tpu.memory_space<vmem>>, vector<16x16x4xf32>,
    %c2_47 = arith.constant 2 : index
    %c0_48 = arith.constant 0 : index
    %c0_49 = arith.constant 0 : index
    %21 = vector.load %arg5[%c2_47, %c0_48, %c0_49] : memref<18x18x4xf32, #tpu.memory_space<vmem>>, vector<16x16x4xf32>
    %c0_50 = arith.constant 0 : index
    %c0_51 = arith.constant 0 : index
    %c24 = arith.constant 24 : index
    %22 = vector.load %arg6[%c0_50, %c0_51, %c24] : memref<16x16x36xf32, #tpu.memory_space<vmem>>, vector<16x16x4xf32>
    tpu.vector_store %arg6[%c0_50, %c0_51, %c24], %21 {strides = array<i32>} : memref<16x16x36xf32, #tpu.memory_space<vmem>>, vector<16x16x4xf32>,
    %c2_52 = arith.constant 2 : index
    %c1_53 = arith.constant 1 : index
    %c0_54 = arith.constant 0 : index
    %23 = vector.load %arg5[%c2_52, %c1_53, %c0_54] : memref<18x18x4xf32, #tpu.memory_space<vmem>>, vector<16x16x4xf32>
    %c0_55 = arith.constant 0 : index
    %c0_56 = arith.constant 0 : index
    %c28 = arith.constant 28 : index
    %24 = vector.load %arg6[%c0_55, %c0_56, %c28] : memref<16x16x36xf32, #tpu.memory_space<vmem>>, vector<16x16x4xf32>
    tpu.vector_store %arg6[%c0_55, %c0_56, %c28], %23 {strides = array<i32>} : memref<16x16x36xf32, #tpu.memory_space<vmem>>, vector<16x16x4xf32>,
    %c2_57 = arith.constant 2 : index
    %c2_58 = arith.constant 2 : index
    %c0_59 = arith.constant 0 : index
    %25 = vector.load %arg5[%c2_57, %c2_58, %c0_59] : memref<18x18x4xf32, #tpu.memory_space<vmem>>, vector<16x16x4xf32>
    %c0_60 = arith.constant 0 : index
    %c0_61 = arith.constant 0 : index
    %c32 = arith.constant 32 : index
    %26 = vector.load %arg6[%c0_60, %c0_61, %c32] : memref<16x16x36xf32, #tpu.memory_space<vmem>>, vector<16x16x4xf32>
    tpu.vector_store %arg6[%c0_60, %c0_61, %c32], %25 {strides = array<i32>} : memref<16x16x36xf32, #tpu.memory_space<vmem>>, vector<16x16x4xf32>,
    %c0_62 = arith.constant 0 : index
    %c0_63 = arith.constant 0 : index
    %c0_64 = arith.constant 0 : index
    %27 = vector.load %arg6[%c0_62, %c0_63, %c0_64] : memref<16x16x36xf32, #tpu.memory_space<vmem>>, vector<16x16x36xf32>
    %28 = vector.shape_cast %27 : vector<16x16x36xf32> to vector<256x36xf32>
    %c0_65 = arith.constant 0 : index
    %c0_66 = arith.constant 0 : index
    %29 = vector.load %arg2[%c0_65, %c0_66] : memref<36x8xf32, #tpu.memory_space<vmem>>, vector<36x8xf32>
    %cst_67 = arith.constant dense<0.000000e+00> : vector<256x8xf32>
    %30 = tpu.matmul %28, %29, %cst_67 {dimension_numbers = #tpu.dot_dimension_numbers<[1], [0], [0], [1], [0, 0, 1, 1], [], []>} : vector<256x36xf32>, vector<36x8xf32>, vector<256x8xf32> -> vector<256x8xf32>
    %c0_68 = arith.constant 0 : index
    %c0_69 = arith.constant 0 : index
    %31 = vector.load %arg3[%c0_68, %c0_69] : memref<1x8xf32, #tpu.memory_space<vmem>>, vector<1x8xf32>
    %32 = vector.broadcast %31 : vector<1x8xf32> to vector<256x8xf32>
    %33 = arith.addf %30, %32 : vector<256x8xf32>
    %34 = tpu.transpose %33, [1, 0] : vector<256x8xf32> -> vector<8x256xf32>
    %c0_70 = arith.constant 0 : index
    %c0_71 = arith.constant 0 : index
    %c0_72 = arith.constant 0 : index
    %35 = vector.load %arg4[%c0_70, %c0_71, %c0_72] : memref<1x8x256xf32, #tpu.memory_space<vmem>>, vector<1x8x256xf32>
    %36 = vector.shape_cast %35 : vector<1x8x256xf32> to vector<8x256xf32>
    %37 = vector.shape_cast %34 : vector<8x256xf32> to vector<1x8x256xf32>
    tpu.vector_store %arg4[%c0_70, %c0_71, %c0_72], %37 {strides = array<i32>} : memref<1x8x256xf32, #tpu.memory_space<vmem>>, vector<1x8x256xf32>,
    return
  }
  func.func @transform_0(%arg0: i32) -> (i32, i32, i32, i32) {
    %c0_i32 = arith.constant 0 : i32
    %c0_i32_0 = arith.constant 0 : i32
    %c0_i32_1 = arith.constant 0 : i32
    %c0_i32_2 = arith.constant 0 : i32
    return %arg0, %c0_i32, %c0_i32_0, %c0_i32_1 : i32, i32, i32, i32
  }
  func.func @transform_1(%arg0: i32) -> (i32, i32) {
    %c0_i32 = arith.constant 0 : i32
    %c0_i32_0 = arith.constant 0 : i32
    %c0_i32_1 = arith.constant 0 : i32
    return %c0_i32, %c0_i32_0 : i32, i32
  }
  func.func @transform_2(%arg0: i32) -> (i32, i32) {
    %c0_i32 = arith.constant 0 : i32
    %c0_i32_0 = arith.constant 0 : i32
    %c0_i32_1 = arith.constant 0 : i32
    return %c0_i32, %c0_i32_0 : i32, i32
  }
  func.func @transform_3(%arg0: i32) -> (i32, i32, i32) {
    %c0_i32 = arith.constant 0 : i32
    %c0_i32_0 = arith.constant 0 : i32
    %c0_i32_1 = arith.constant 0 : i32
    return %arg0, %c0_i32, %c0_i32_0 : i32, i32, i32
  }
}

</mosaic_0001>

<llo_original>
// kernel: tpu_custom_call.1
$region0: #{tpu_custom_call.1}
  #allocation0 [shape = 'u32[]', space=smem, size = 0x4, offset = 0x4, fixed_abs, tag = 'smem constant byte address 0x4 - core index']
  #allocation1 [shape = 'u32[144,128]{1,0:T(1,128)}', space=vmem, size = 0x12000, scoped, tag = 'internal scratch']
  #allocation2 [shape = 'f32[18,18,4]{2,1,0:T(8,128)}', space=vmem, size = 0x36000, scoped, tag = 'scratch operand']
  #allocation3 [shape = 'f32[16,16,36]{2,1,0:T(8,128)}', space=vmem, size = 0x20000, scoped, tag = 'scratch operand']
  %s0 = inlined_call_operand.vmem [shape: f32[2,16,16,4], index: 0, kind: input, shape index: {}]
  %s1 = inlined_call_operand.vmem [shape: f32[36,8], index: 1, kind: input, shape index: {}]
  %s2 = inlined_call_operand.vmem [shape: f32[1,8], index: 2, kind: input, shape index: {}]
  %s3 = inlined_call_operand.hbm [shape: f32[2,8,256], index: 3, kind: output, shape index: {}]
  %s4 = sld [smem:[#allocation0]]
  $region45: #{tpu_custom_call.1} parent=0
    _
  %s6 = ssub.s32 1, %s4
  %s7 = scalar_select 0, %s6, %s4
  $region1: #{tpu_custom_call.1} parent=0
    #allocation4 [shape = 'u8[16384]{0}', space=vmem, size = 0x4000, scoped, tag = 'output window, operand 0']
    #allocation5 [shape = 's32[2]{0}', space=sflag, size = 0x8, scoped, tag = 'scoped memory for tpu_custom_call.1']
    %8 = vsyncpa [#allocation5], 0
    %s9 = scalar_lea.sflag [#allocation5], 1
    %10 = vsyncpa %s9, 0
    loop: start=0, step=1, limit=4
    $region2: #{tpu_custom_call.1} parent=1 // loop_pre_header
      _
    $region3: #{tpu_custom_call.1} parent=1 // loop_header
      %s12 = sphi 0, %s16
      %p13 = scmp.ge.s32.totalorder %s12, 4
      %s22 = sphi 0, %s24
      %s25 = sphi 0, %s22
      %s26 = sphi 0, %s25
      %s42 = sphi 0, %s26
      %s46 = sphi 0, %s46
      %s48 = sphi 0, %s46
      %s49 = sphi 0, %s48
      %s63 = sphi 0, %s49
      %s67 = sphi 0, %s67
      %s69 = sphi 0, %s67
      %s70 = sphi 0, %s69
      %s84 = sphi 0, %s70
      %s90 = sphi 0, %s92
      %s93 = sphi 0, %s90
      %s94 = sphi 0, %s93
      %s110 = sphi 0, %s94
    $region4: #{tpu_custom_call.1} parent=1 // loop_header_branch
      %15 = sbr.rel (%p13) target = $region8
    $region5: #{tpu_custom_call.1} parent=1 // loop_body
      %s17 = ssub.s32 %s12, 1
      %s18 = ssub.s32 %s12, 2
      %s19 = sadd.s32 %s12, 1
      %s20 = ssub.s32 %s12, %s19
      %p21 = scmp.eq.s32.totalorder %s20, 0
      %s23 = sadd.s32 %s22, 1
      %s24 = scalar_select %p21, %s22, %s23
      %p27 = pneg %p21
      %p28 = scmp.eq.s32.totalorder %s12, 1
      %p29 = por %p27, %p28
      %p30 = scmp.ne.s32.totalorder %s22, %s25
      %p31 = scmp.eq.s32.totalorder %s12, 0
      %p32 = por %p30, %p31
      %p33 = scmp.ne.s32.totalorder %s22, %s25
      %p34 = scmp.eq.s32.totalorder %s17, 1
      %p35 = por %p33, %p34
      %p36 = scmp.ne.s32.totalorder %s25, %s26
      %p37 = scmp.eq.s32.totalorder %s17, 0
      %p38 = por %p36, %p37
      %p39 = scmp.ne.s32.totalorder %s25, %s26
      %p40 = scmp.eq.s32.totalorder %s18, 1
      %p41 = por %p39, %p40
      %p43 = scmp.ne.s32.totalorder %s26, %s42
      %p44 = scmp.eq.s32.totalorder %s18, 0
      %p45 = por %p43, %p44
      %s47 = sadd.s32 %s46, 1
      %p50 = scmp.eq.s32.totalorder %s12, 1
      %p51 = scmp.ne.s32.totalorder %s46, %s48
      %p52 = scmp.eq.s32.totalorder %s12, 0
      %p53 = por %p51, %p52
      %p54 = scmp.ne.s32.totalorder %s46, %s48
      %p55 = scmp.eq.s32.totalorder %s17, 1
      %p56 = por %p54, %p55
      %p57 = scmp.ne.s32.totalorder %s48, %s49
      %p58 = scmp.eq.s32.totalorder %s17, 0
      %p59 = por %p57, %p58
      %p60 = scmp.ne.s32.totalorder %s48, %s49
      %p61 = scmp.eq.s32.totalorder %s18, 1
      %p62 = por %p60, %p61
      %p64 = scmp.ne.s32.totalorder %s49, %s63
      %p65 = scmp.eq.s32.totalorder %s18, 0
      %p66 = por %p64, %p65
      %s68 = sadd.s32 %s67, 1
      %p71 = scmp.eq.s32.totalorder %s12, 1
      %p72 = scmp.ne.s32.totalorder %s67, %s69
      %p73 = scmp.eq.s32.totalorder %s12, 0
      %p74 = por %p72, %p73
      %p75 = scmp.ne.s32.totalorder %s67, %s69
      %p76 = scmp.eq.s32.totalorder %s17, 1
      %p77 = por %p75, %p76
      %p78 = scmp.ne.s32.totalorder %s69, %s70
      %p79 = scmp.eq.s32.totalorder %s17, 0
      %p80 = por %p78, %p79
      %p81 = scmp.ne.s32.totalorder %s69, %s70
      %p82 = scmp.eq.s32.totalorder %s18, 1
      %p83 = por %p81, %p82
      %p85 = scmp.ne.s32.totalorder %s70, %s84
      %p86 = scmp.eq.s32.totalorder %s18, 0
      %p87 = por %p85, %p86
      %s88 = ssub.s32 %s12, %s19
      %p89 = scmp.eq.s32.totalorder %s88, 0
      %s91 = sadd.s32 %s90, 1
      %s92 = scalar_select %p89, %s90, %s91
      %p95 = pneg %p89
      %p96 = scmp.eq.s32.totalorder %s12, 1
      %p97 = por %p95, %p96
      %p98 = scmp.ne.s32.totalorder %s90, %s93
      %p99 = scmp.eq.s32.totalorder %s12, 0
      %p100 = por %p98, %p99
      %p101 = scmp.ne.s32.totalorder %s90, %s93
      %p102 = scmp.eq.s32.totalorder %s17, 1
      %p103 = por %p101, %p102
      %p104 = scmp.ne.s32.totalorder %s93, %s94
      %p105 = scmp.eq.s32.totalorder %s17, 0
      %p106 = por %p104, %p105
      %p107 = scmp.ne.s32.totalorder %s93, %s94
      %p108 = scmp.eq.s32.totalorder %s18, 1
      %p109 = por %p107, %p108
      %p111 = scmp.ne.s32.totalorder %s94, %s110
      %p112 = scmp.eq.s32.totalorder %s18, 0
      %p113 = por %p111, %p112
      %p114 = scmp.le.s32.totalorder 1, %s12
      %p115 = scmp.lt.s32.totalorder %s12, 3
      %p116 = pnand %p114, %p115
      %p117 = pneg %p116
      // Predicated region
      $region9: #{tpu_custom_call.1} parent=5 // pred_check
        _
      $region10: #{tpu_custom_call.1} parent=5 // pred_check_branch
        %119 = sbr.rel (%p116) target = $region12
      $region11: #{tpu_custom_call.1} parent=5 // pred_region
        %s120 = ssub.s32 %s12, 1
        // Predicated region
        $region13: #{tpu_custom_call.1} parent=11 // pred_check
          %p121 = pneg %p59
        $region14: #{tpu_custom_call.1} parent=11 // pred_check_branch
          %123 = sbr.rel (%p121) target = $region16
        $region15: #{tpu_custom_call.1} parent=11 // pred_region
          _
        $region16: #{tpu_custom_call.1} parent=11 // pred_fallthru
          _
        // Predicated region
        $region17: #{tpu_custom_call.1} parent=11 // pred_check
          %p124 = pneg %p80
        $region18: #{tpu_custom_call.1} parent=11 // pred_check_branch
          %126 = sbr.rel (%p124) target = $region20
        $region19: #{tpu_custom_call.1} parent=11 // pred_region
          _
        $region20: #{tpu_custom_call.1} parent=11 // pred_fallthru
          _
      $region12: #{tpu_custom_call.1} parent=5 // pred_fallthru
        _
      %p127 = scmp.lt.s32.totalorder %s12, 2
      // Predicated region
      $region21: #{tpu_custom_call.1} parent=5 // pred_check
        %p128 = pneg %p127
      $region22: #{tpu_custom_call.1} parent=5 // pred_check_branch
        %130 = sbr.rel (%p128) target = $region24
      $region23: #{tpu_custom_call.1} parent=5 // pred_region
        // Predicated region
        $region25: #{tpu_custom_call.1} parent=23 // pred_check
          %p131 = pneg %p32
        $region26: #{tpu_custom_call.1} parent=23 // pred_check_branch
          %133 = sbr.rel (%p131) target = $region28
        $region27: #{tpu_custom_call.1} parent=23 // pred_region
          %p134 = scmp.lt.s32.totalorder %s12, 1
          %s135 = scalar_select %p134, %s12, 1
          %s136 = smul.addr %s135, 32
          %s137 = smul.addr %s136, 8
          %s138 = scalar_lea.vmem %s0, %s137
        $region28: #{tpu_custom_call.1} parent=23 // pred_fallthru
          _
      $region24: #{tpu_custom_call.1} parent=5 // pred_fallthru
        _
      %p139 = scmp.le.s32.totalorder 1, %s12
      %p140 = scmp.lt.s32.totalorder %s12, 3
      %p141 = pnand %p139, %p140
      %p142 = pneg %p141
      // Predicated region
      $region29: #{tpu_custom_call.1} parent=5 // pred_check
        _
      $region30: #{tpu_custom_call.1} parent=5 // pred_check_branch
        %144 = sbr.rel (%p141) target = $region32
      $region31: #{tpu_custom_call.1} parent=5 // pred_region
        %s145 = ssub.s32 %s12, 1
        %p146 = scmp.lt.s32.totalorder %s17, 1
        %s147 = scalar_select %p146, %s17, 1
        %s148 = smul.addr %s147, 32
        %s149 = smul.addr %s148, 8
        %s150 = scalar_lea.vmem %s0, %s149
        %p151 = pneg %p38
        %p152 = pneg %p35
        %p153 = pneg %p59
        %p154 = pneg %p56
        %p155 = pneg %p80
        %p156 = pneg %p77
        %p157 = pneg %p106
        %p158 = pneg %p103
        %s159 = sand.u32 %s93, 1
        %s160 = scalar_lea.sflag [#allocation5], %s159
        %s161 = sand.u32 %s93, 1
        %s162 = smul.addr %s161, 16
        %s163 = scalar_lea.vmem [#allocation4], %s162
        %p164 = scmp.lt.s32.totalorder %s17, 1
        %s165 = scalar_select %p164, %s17, 1
        %s166 = smul.addr %s165, 32
        %s167 = smul.addr %s166, 8
        %s168 = scalar_lea.vmem %s0, %s167
        %vm169 = vcmask 31744
        %170 = vst.msk [vmem:[#allocation2] sm:$0xff] %vm169, 0.0
        %171 = vst.msk [vmem:[#allocation2 + $0x8] sm:$0xff] %vm169, 0.0
        %vm172 = vcmask 25600
        %173 = vst.msk [vmem:[#allocation2 + $0x10] sm:$0x3] %vm172, 0.0
        %s174 = scalar_lea.vmem [#allocation2], 408
        %175 = vst.msk [vmem:[%s174] sm:$0xff] %vm169, 0.0
        %176 = vst.msk [vmem:[%s174 + $0x8] sm:$0xff] %vm169, 0.0
        %177 = vst.msk [vmem:[%s174 + $0x10] sm:$0x3] %vm172, 0.0
        %vm178 = vcmask 24576
        %179 = vst.msk [vmem:[#allocation2] sm:$0x1] %vm178, 0.0
        %180 = vst.msk [vmem:[#allocation2 + $0x18] sm:$0x1] %vm178, 0.0
        %181 = vst.msk [vmem:[#allocation2 + $0x30] sm:$0x1] %vm178, 0.0
        %182 = vst.msk [vmem:[#allocation2 + $0x48] sm:$0x1] %vm178, 0.0
        %183 = vst.msk [vmem:[#allocation2 + $0x60] sm:$0x1] %vm178, 0.0
        %184 = vst.msk [vmem:[#allocation2 + $0x78] sm:$0x1] %vm178, 0.0
        %185 = vst.msk [vmem:[#allocation2 + $0x90] sm:$0x1] %vm178, 0.0
        %186 = vst.msk [vmem:[#allocation2 + $0xa8] sm:$0x1] %vm178, 0.0
        %187 = vst.msk [vmem:[#allocation2 + $0xc0] sm:$0x1] %vm178, 0.0
        %188 = vst.msk [vmem:[#allocation2 + $0xd8] sm:$0x1] %vm178, 0.0
        %189 = vst.msk [vmem:[#allocation2 + $0xf0] sm:$0x1] %vm178, 0.0
        %190 = vst.msk [vmem:[#allocation2 + $0x108] sm:$0x1] %vm178, 0.0
        %191 = vst.msk [vmem:[#allocation2 + $0x120] sm:$0x1] %vm178, 0.0
        %192 = vst.msk [vmem:[#allocation2 + $0x138] sm:$0x1] %vm178, 0.0
        %193 = vst.msk [vmem:[#allocation2 + $0x150] sm:$0x1] %vm178, 0.0
        %194 = vst.msk [vmem:[#allocation2 + $0x168] sm:$0x1] %vm178, 0.0
        %195 = vst.msk [vmem:[#allocation2 + $0x180] sm:$0x1] %vm178, 0.0
        %196 = vst.msk [vmem:[#allocation2 + $0x198] sm:$0x1] %vm178, 0.0
        %197 = vst.msk [vmem:[#allocation2 + $0x11] sm:$0x1] %vm178, 0.0
        %198 = vst.msk [vmem:[#allocation2 + $0x29] sm:$0x1] %vm178, 0.0
        %199 = vst.msk [vmem:[#allocation2 + $0x41] sm:$0x1] %vm178, 0.0
        %200 = vst.msk [vmem:[#allocation2 + $0x59] sm:$0x1] %vm178, 0.0
        %201 = vst.msk [vmem:[#allocation2 + $0x71] sm:$0x1] %vm178, 0.0
        %202 = vst.msk [vmem:[#allocation2 + $0x89] sm:$0x1] %vm178, 0.0
        %203 = vst.msk [vmem:[#allocation2 + $0xa1] sm:$0x1] %vm178, 0.0
        %204 = vst.msk [vmem:[#allocation2 + $0xb9] sm:$0x1] %vm178, 0.0
        %205 = vst.msk [vmem:[#allocation2 + $0xd1] sm:$0x1] %vm178, 0.0
        %206 = vst.msk [vmem:[#allocation2 + $0xe9] sm:$0x1] %vm178, 0.0
        %207 = vst.msk [vmem:[#allocation2 + $0x101] sm:$0x1] %vm178, 0.0
        %208 = vst.msk [vmem:[#allocation2 + $0x119] sm:$0x1] %vm178, 0.0
        %209 = vst.msk [vmem:[#allocation2 + $0x131] sm:$0x1] %vm178, 0.0
        %210 = vst.msk [vmem:[#allocation2 + $0x149] sm:$0x1] %vm178, 0.0
        %211 = vst.msk [vmem:[#allocation2 + $0x161] sm:$0x1] %vm178, 0.0
        %212 = vst.msk [vmem:[#allocation2 + $0x179] sm:$0x1] %vm178, 0.0
        %213 = vst.msk [vmem:[#allocation2 + $0x191] sm:$0x1] %vm178, 0.0
        %214 = vst.msk [vmem:[#allocation2 + $0x1a9] sm:$0x1] %vm178, 0.0
        %v215 = vld [vmem:[%s168] sm:$0xff]
        %v216 = vld [vmem:[%s168 + $0x8] sm:$0xff]
        %v217 = vld [vmem:[%s168 + $0x10] sm:$0xff]
        %v218 = vld [vmem:[%s168 + $0x18] sm:$0xff]
        %v219 = vld [vmem:[%s168 + $0x20] sm:$0xff]
        %v220 = vld [vmem:[%s168 + $0x28] sm:$0xff]
        %v221 = vld [vmem:[%s168 + $0x30] sm:$0xff]
        %v222 = vld [vmem:[%s168 + $0x38] sm:$0xff]
        %v223 = vld [vmem:[%s168 + $0x40] sm:$0xff]
        %v224 = vld [vmem:[%s168 + $0x48] sm:$0xff]
        %v225 = vld [vmem:[%s168 + $0x50] sm:$0xff]
        %v226 = vld [vmem:[%s168 + $0x58] sm:$0xff]
        %v227 = vld [vmem:[%s168 + $0x60] sm:$0xff]
        %v228 = vld [vmem:[%s168 + $0x68] sm:$0xff]
        %v229 = vld [vmem:[%s168 + $0x70] sm:$0xff]
        %v230 = vld [vmem:[%s168 + $0x78] sm:$0xff]
        %v231 = vld [vmem:[%s168 + $0x80] sm:$0xff]
        %v232 = vld [vmem:[%s168 + $0x88] sm:$0xff]
        %v233 = vld [vmem:[%s168 + $0x90] sm:$0xff]
        %v234 = vld [vmem:[%s168 + $0x98] sm:$0xff]
        %v235 = vld [vmem:[%s168 + $0xa0] sm:$0xff]
        %v236 = vld [vmem:[%s168 + $0xa8] sm:$0xff]
        %v237 = vld [vmem:[%s168 + $0xb0] sm:$0xff]
        %v238 = vld [vmem:[%s168 + $0xb8] sm:$0xff]
        %v239 = vld [vmem:[%s168 + $0xc0] sm:$0xff]
        %v240 = vld [vmem:[%s168 + $0xc8] sm:$0xff]
        %v241 = vld [vmem:[%s168 + $0xd0] sm:$0xff]
        %v242 = vld [vmem:[%s168 + $0xd8] sm:$0xff]
        %v243 = vld [vmem:[%s168 + $0xe0] sm:$0xff]
        %v244 = vld [vmem:[%s168 + $0xe8] sm:$0xff]
        %v245 = vld [vmem:[%s168 + $0xf0] sm:$0xff]
        %v246 = vld [vmem:[%s168 + $0xf8] sm:$0xff]
        %s247 = scalar_lea.vmem [#allocation2], 24
        %248 = vst.msk [vmem:[%s247 + $0x1] sm:$0xff] %vm169, %v215
        %249 = vst.msk [vmem:[%s247 + $0x9] sm:$0xff] %vm169, %v216
        %250 = vst.msk [vmem:[%s247 + $0x19] sm:$0xff] %vm169, %v217
        %251 = vst.msk [vmem:[%s247 + $0x21] sm:$0xff] %vm169, %v218
        %252 = vst.msk [vmem:[%s247 + $0x31] sm:$0xff] %vm169, %v219
        %253 = vst.msk [vmem:[%s247 + $0x39] sm:$0xff] %vm169, %v220
        %254 = vst.msk [vmem:[%s247 + $0x49] sm:$0xff] %vm169, %v221
        %255 = vst.msk [vmem:[%s247 + $0x51] sm:$0xff] %vm169, %v222
        %256 = vst.msk [vmem:[%s247 + $0x61] sm:$0xff] %vm169, %v223
        %257 = vst.msk [vmem:[%s247 + $0x69] sm:$0xff] %vm169, %v224
        %258 = vst.msk [vmem:[%s247 + $0x79] sm:$0xff] %vm169, %v225
        %259 = vst.msk [vmem:[%s247 + $0x81] sm:$0xff] %vm169, %v226
        %260 = vst.msk [vmem:[%s247 + $0x91] sm:$0xff] %vm169, %v227
        %261 = vst.msk [vmem:[%s247 + $0x99] sm:$0xff] %vm169, %v228
        %262 = vst.msk [vmem:[%s247 + $0xa9] sm:$0xff] %vm169, %v229
        %263 = vst.msk [vmem:[%s247 + $0xb1] sm:$0xff] %vm169, %v230
        %264 = vst.msk [vmem:[%s247 + $0xc1] sm:$0xff] %vm169, %v231
        %265 = vst.msk [vmem:[%s247 + $0xc9] sm:$0xff] %vm169, %v232
        %266 = vst.msk [vmem:[%s247 + $0xd9] sm:$0xff] %vm169, %v233
        %267 = vst.msk [vmem:[%s247 + $0xe1] sm:$0xff] %vm169, %v234
        %268 = vst.msk [vmem:[%s247 + $0xf1] sm:$0xff] %vm169, %v235
        %269 = vst.msk [vmem:[%s247 + $0xf9] sm:$0xff] %vm169, %v236
        %270 = vst.msk [vmem:[%s247 + $0x109] sm:$0xff] %vm169, %v237
        %271 = vst.msk [vmem:[%s247 + $0x111] sm:$0xff] %vm169, %v238
        %272 = vst.msk [vmem:[%s247 + $0x121] sm:$0xff] %vm169, %v239
        %273 = vst.msk [vmem:[%s247 + $0x129] sm:$0xff] %vm169, %v240
        %274 = vst.msk [vmem:[%s247 + $0x139] sm:$0xff] %vm169, %v241
        %275 = vst.msk [vmem:[%s247 + $0x141] sm:$0xff] %vm169, %v242
        %276 = vst.msk [vmem:[%s247 + $0x151] sm:$0xff] %vm169, %v243
        %277 = vst.msk [vmem:[%s247 + $0x159] sm:$0xff] %vm169, %v244
        %278 = vst.msk [vmem:[%s247 + $0x169] sm:$0xff] %vm169, %v245
        %279 = vst.msk [vmem:[%s247 + $0x171] sm:$0xff] %vm169, %v246
        %v280 = vld [vmem:[#allocation2] sm:$0xff]
        %v281 = vld [vmem:[#allocation2 + $0x8] sm:$0xff]
        %v282 = vld [vmem:[#allocation2 + $0x18] sm:$0xff]
        %v283 = vld [vmem:[#allocation2 + $0x20] sm:$0xff]
        %v284 = vld [vmem:[#allocation2 + $0x30] sm:$0xff]
        %v285 = vld [vmem:[#allocation2 + $0x38] sm:$0xff]
        %v286 = vld [vmem:[#allocation2 + $0x48] sm:$0xff]
        %v287 = vld [vmem:[#allocation2 + $0x50] sm:$0xff]
        %v288 = vld [vmem:[#allocation2 + $0x60] sm:$0xff]
        %v289 = vld [vmem:[#allocation2 + $0x68] sm:$0xff]
        %v290 = vld [vmem:[#allocation2 + $0x78] sm:$0xff]
        %v291 = vld [vmem:[#allocation2 + $0x80] sm:$0xff]
        %v292 = vld [vmem:[#allocation2 + $0x90] sm:$0xff]
        %v293 = vld [vmem:[#allocation2 + $0x98] sm:$0xff]
        %v294 = vld [vmem:[#allocation2 + $0xa8] sm:$0xff]
        %v295 = vld [vmem:[#allocation2 + $0xb0] sm:$0xff]
        %v296 = vld [vmem:[#allocation2 + $0xc0] sm:$0xff]
        %v297 = vld [vmem:[#allocation2 + $0xc8] sm:$0xff]
        %v298 = vld [vmem:[#allocation2 + $0xd8] sm:$0xff]
        %v299 = vld [vmem:[#allocation2 + $0xe0] sm:$0xff]
        %v300 = vld [vmem:[#allocation2 + $0xf0] sm:$0xff]
        %v301 = vld [vmem:[#allocation2 + $0xf8] sm:$0xff]
        %v302 = vld [vmem:[#allocation2 + $0x108] sm:$0xff]
        %v303 = vld [vmem:[#allocation2 + $0x110] sm:$0xff]
        %v304 = vld [vmem:[#allocation2 + $0x120] sm:$0xff]
        %v305 = vld [vmem:[#allocation2 + $0x128] sm:$0xff]
        %v306 = vld [vmem:[#allocation2 + $0x138] sm:$0xff]
        %v307 = vld [vmem:[#allocation2 + $0x140] sm:$0xff]
        %v308 = vld [vmem:[#allocation2 + $0x150] sm:$0xff]
        %v309 = vld [vmem:[#allocation2 + $0x158] sm:$0xff]
        %v310 = vld [vmem:[#allocation2 + $0x168] sm:$0xff]
        %v311 = vld [vmem:[#allocation2 + $0x170] sm:$0xff]
        %312 = vst.msk [vmem:[#allocation3] sm:$0xff] %vm169, %v280
        %313 = vst.msk [vmem:[#allocation3 + $0x8] sm:$0xff] %vm169, %v281
        %314 = vst.msk [vmem:[#allocation3 + $0x10] sm:$0xff] %vm169, %v282
        %315 = vst.msk [vmem:[#allocation3 + $0x18] sm:$0xff] %vm169, %v283
        %316 = vst.msk [vmem:[#allocation3 + $0x20] sm:$0xff] %vm169, %v284
        %317 = vst.msk [vmem:[#allocation3 + $0x28] sm:$0xff] %vm169, %v285
        %318 = vst.msk [vmem:[#allocation3 + $0x30] sm:$0xff] %vm169, %v286
        %319 = vst.msk [vmem:[#allocation3 + $0x38] sm:$0xff] %vm169, %v287
        %320 = vst.msk [vmem:[#allocation3 + $0x40] sm:$0xff] %vm169, %v288
        %321 = vst.msk [vmem:[#allocation3 + $0x48] sm:$0xff] %vm169, %v289
        %322 = vst.msk [vmem:[#allocation3 + $0x50] sm:$0xff] %vm169, %v290
        %323 = vst.msk [vmem:[#allocation3 + $0x58] sm:$0xff] %vm169, %v291
        %324 = vst.msk [vmem:[#allocation3 + $0x60] sm:$0xff] %vm169, %v292
        %325 = vst.msk [vmem:[#allocation3 + $0x68] sm:$0xff] %vm169, %v293
        %326 = vst.msk [vmem:[#allocation3 + $0x70] sm:$0xff] %vm169, %v294
        %327 = vst.msk [vmem:[#allocation3 + $0x78] sm:$0xff] %vm169, %v295
        %328 = vst.msk [vmem:[#allocation3 + $0x80] sm:$0xff] %vm169, %v296
        %329 = vst.msk [vmem:[#allocation3 + $0x88] sm:$0xff] %vm169, %v297
        %330 = vst.msk [vmem:[#allocation3 + $0x90] sm:$0xff] %vm169, %v298
        %331 = vst.msk [vmem:[#allocation3 + $0x98] sm:$0xff] %vm169, %v299
        %332 = vst.msk [vmem:[#allocation3 + $0xa0] sm:$0xff] %vm169, %v300
        %333 = vst.msk [vmem:[#allocation3 + $0xa8] sm:$0xff] %vm169, %v301
        %334 = vst.msk [vmem:[#allocation3 + $0xb0] sm:$0xff] %vm169, %v302
        %335 = vst.msk [vmem:[#allocation3 + $0xb8] sm:$0xff] %vm169, %v303
        %336 = vst.msk [vmem:[#allocation3 + $0xc0] sm:$0xff] %vm169, %v304
        %337 = vst.msk [vmem:[#allocation3 + $0xc8] sm:$0xff] %vm169, %v305
        %338 = vst.msk [vmem:[#allocation3 + $0xd0] sm:$0xff] %vm169, %v306
        %339 = vst.msk [vmem:[#allocation3 + $0xd8] sm:$0xff] %vm169, %v307
        %340 = vst.msk [vmem:[#allocation3 + $0xe0] sm:$0xff] %vm169, %v308
        %341 = vst.msk [vmem:[#allocation3 + $0xe8] sm:$0xff] %vm169, %v309
        %342 = vst.msk [vmem:[#allocation3 + $0xf0] sm:$0xff] %vm169, %v310
        %343 = vst.msk [vmem:[#allocation3 + $0xf8] sm:$0xff] %vm169, %v311
        %v344 = vld [vmem:[#allocation2 + $0x1] sm:$0xff]
        %v345 = vld [vmem:[#allocation2 + $0x9] sm:$0xff]
        %v346 = vld [vmem:[#allocation2 + $0x19] sm:$0xff]
        %v347 = vld [vmem:[#allocation2 + $0x21] sm:$0xff]
        %v348 = vld [vmem:[#allocation2 + $0x31] sm:$0xff]
        %v349 = vld [vmem:[#allocation2 + $0x39] sm:$0xff]
        %v350 = vld [vmem:[#allocation2 + $0x49] sm:$0xff]
        %v351 = vld [vmem:[#allocation2 + $0x51] sm:$0xff]
        %v352 = vld [vmem:[#allocation2 + $0x61] sm:$0xff]
        %v353 = vld [vmem:[#allocation2 + $0x69] sm:$0xff]
        %v354 = vld [vmem:[#allocation2 + $0x79] sm:$0xff]
        %v355 = vld [vmem:[#allocation2 + $0x81] sm:$0xff]
        %v356 = vld [vmem:[#allocation2 + $0x91] sm:$0xff]
        %v357 = vld [vmem:[#allocation2 + $0x99] sm:$0xff]
        %v358 = vld [vmem:[#allocation2 + $0xa9] sm:$0xff]
        %v359 = vld [vmem:[#allocation2 + $0xb1] sm:$0xff]
        %v360 = vld [vmem:[#allocation2 + $0xc1] sm:$0xff]
        %v361 = vld [vmem:[#allocation2 + $0xc9] sm:$0xff]
        %v362 = vld [vmem:[#allocation2 + $0xd9] sm:$0xff]
        %v363 = vld [vmem:[#allocation2 + $0xe1] sm:$0xff]
        %v364 = vld [vmem:[#allocation2 + $0xf1] sm:$0xff]
        %v365 = vld [vmem:[#allocation2 + $0xf9] sm:$0xff]
        %v366 = vld [vmem:[#allocation2 + $0x109] sm:$0xff]
        %v367 = vld [vmem:[#allocation2 + $0x111] sm:$0xff]
        %v368 = vld [vmem:[#allocation2 + $0x121] sm:$0xff]
        %v369 = vld [vmem:[#allocation2 + $0x129] sm:$0xff]
        %v370 = vld [vmem:[#allocation2 + $0x139] sm:$0xff]
        %v371 = vld [vmem:[#allocation2 + $0x141] sm:$0xff]
        %v372 = vld [vmem:[#allocation2 + $0x151] sm:$0xff]
        %v373 = vld [vmem:[#allocation2 + $0x159] sm:$0xff]
        %v374 = vld [vmem:[#allocation2 + $0x169] sm:$0xff]
        %v375 = vld [vmem:[#allocation2 + $0x171] sm:$0xff]
        %408 = vrot.lane.b32.xlu0 %v344, 4
        %v409 = vpop.permute.xlu0 %408
        %410 = vrot.lane.b32.xlu0 %v345, 4
        %v411 = vpop.permute.xlu0 %410
        %412 = vrot.lane.b32.xlu0 %v346, 4
        %v413 = vpop.permute.xlu0 %412
        %414 = vrot.lane.b32.xlu0 %v347, 4
        %v415 = vpop.permute.xlu0 %414
        %416 = vrot.lane.b32.xlu0 %v348, 4
        %v417 = vpop.permute.xlu0 %416
        %418 = vrot.lane.b32.xlu0 %v349, 4
        %v419 = vpop.permute.xlu0 %418
        %420 = vrot.lane.b32.xlu0 %v350, 4
        %v421 = vpop.permute.xlu0 %420
        %422 = vrot.lane.b32.xlu0 %v351, 4
        %v423 = vpop.permute.xlu0 %422
        %424 = vrot.lane.b32.xlu0 %v352, 4
        %v425 = vpop.permute.xlu0 %424
        %426 = vrot.lane.b32.xlu0 %v353, 4
        %v427 = vpop.permute.xlu0 %426
        %428 = vrot.lane.b32.xlu0 %v354, 4
        %v429 = vpop.permute.xlu0 %428
        %430 = vrot.lane.b32.xlu0 %v355, 4
        %v431 = vpop.permute.xlu0 %430
        %432 = vrot.lane.b32.xlu0 %v356, 4
        %v433 = vpop.permute.xlu0 %432
        %434 = vrot.lane.b32.xlu0 %v357, 4
        %v435 = vpop.permute.xlu0 %434
        %436 = vrot.lane.b32.xlu0 %v358, 4
        %v437 = vpop.permute.xlu0 %436
        %438 = vrot.lane.b32.xlu0 %v359, 4
        %v439 = vpop.permute.xlu0 %438
        %440 = vrot.lane.b32.xlu0 %v360, 4
        %v441 = vpop.permute.xlu0 %440
        %442 = vrot.lane.b32.xlu0 %v361, 4
        %v443 = vpop.permute.xlu0 %442
        %444 = vrot.lane.b32.xlu0 %v362, 4
        %v445 = vpop.permute.xlu0 %444
        %446 = vrot.lane.b32.xlu0 %v363, 4
        %v447 = vpop.permute.xlu0 %446
        %448 = vrot.lane.b32.xlu0 %v364, 4
        %v449 = vpop.permute.xlu0 %448
        %450 = vrot.lane.b32.xlu0 %v365, 4
        %v451 = vpop.permute.xlu0 %450
        %452 = vrot.lane.b32.xlu0 %v366, 4
        %v453 = vpop.permute.xlu0 %452
        %454 = vrot.lane.b32.xlu0 %v367, 4
        %v455 = vpop.permute.xlu0 %454
        %456 = vrot.lane.b32.xlu0 %v368, 4
        %v457 = vpop.permute.xlu0 %456
        %458 = vrot.lane.b32.xlu0 %v369, 4
        %v459 = vpop.permute.xlu0 %458
        %460 = vrot.lane.b32.xlu0 %v370, 4
        %v461 = vpop.permute.xlu0 %460
        %462 = vrot.lane.b32.xlu0 %v371, 4
        %v463 = vpop.permute.xlu0 %462
        %464 = vrot.lane.b32.xlu0 %v372, 4
        %v465 = vpop.permute.xlu0 %464
        %466 = vrot.lane.b32.xlu0 %v373, 4
        %v467 = vpop.permute.xlu0 %466
        %468 = vrot.lane.b32.xlu0 %v374, 4
        %v469 = vpop.permute.xlu0 %468
        %470 = vrot.lane.b32.xlu0 %v375, 4
        %v471 = vpop.permute.xlu0 %470
        %vm504 = vcmask 64544
        %505 = vst.msk [vmem:[#allocation3] sm:$0xff] %vm504, %v409
        %506 = vst.msk [vmem:[#allocation3 + $0x8] sm:$0xff] %vm504, %v411
        %507 = vst.msk [vmem:[#allocation3 + $0x10] sm:$0xff] %vm504, %v413
        %508 = vst.msk [vmem:[#allocation3 + $0x18] sm:$0xff] %vm504, %v415
        %509 = vst.msk [vmem:[#allocation3 + $0x20] sm:$0xff] %vm504, %v417
        %510 = vst.msk [vmem:[#allocation3 + $0x28] sm:$0xff] %vm504, %v419
        %511 = vst.msk [vmem:[#allocation3 + $0x30] sm:$0xff] %vm504, %v421
        %512 = vst.msk [vmem:[#allocation3 + $0x38] sm:$0xff] %vm504, %v423
        %513 = vst.msk [vmem:[#allocation3 + $0x40] sm:$0xff] %vm504, %v425
        %514 = vst.msk [vmem:[#allocation3 + $0x48] sm:$0xff] %vm504, %v427
        %515 = vst.msk [vmem:[#allocation3 + $0x50] sm:$0xff] %vm504, %v429
        %516 = vst.msk [vmem:[#allocation3 + $0x58] sm:$0xff] %vm504, %v431
        %517 = vst.msk [vmem:[#allocation3 + $0x60] sm:$0xff] %vm504, %v433
        %518 = vst.msk [vmem:[#allocation3 + $0x68] sm:$0xff] %vm504, %v435
        %519 = vst.msk [vmem:[#allocation3 + $0x70] sm:$0xff] %vm504, %v437
        %520 = vst.msk [vmem:[#allocation3 + $0x78] sm:$0xff] %vm504, %v439
        %521 = vst.msk [vmem:[#allocation3 + $0x80] sm:$0xff] %vm504, %v441
        %522 = vst.msk [vmem:[#allocation3 + $0x88] sm:$0xff] %vm504, %v443
        %523 = vst.msk [vmem:[#allocation3 + $0x90] sm:$0xff] %vm504, %v445
        %524 = vst.msk [vmem:[#allocation3 + $0x98] sm:$0xff] %vm504, %v447
        %525 = vst.msk [vmem:[#allocation3 + $0xa0] sm:$0xff] %vm504, %v449
        %526 = vst.msk [vmem:[#allocation3 + $0xa8] sm:$0xff] %vm504, %v451
        %527 = vst.msk [vmem:[#allocation3 + $0xb0] sm:$0xff] %vm504, %v453
        %528 = vst.msk [vmem:[#allocation3 + $0xb8] sm:$0xff] %vm504, %v455
        %529 = vst.msk [vmem:[#allocation3 + $0xc0] sm:$0xff] %vm504, %v457
        %530 = vst.msk [vmem:[#allocation3 + $0xc8] sm:$0xff] %vm504, %v459
        %531 = vst.msk [vmem:[#allocation3 + $0xd0] sm:$0xff] %vm504, %v461
        %532 = vst.msk [vmem:[#allocation3 + $0xd8] sm:$0xff] %vm504, %v463
        %533 = vst.msk [vmem:[#allocation3 + $0xe0] sm:$0xff] %vm504, %v465
        %534 = vst.msk [vmem:[#allocation3 + $0xe8] sm:$0xff] %vm504, %v467
        %535 = vst.msk [vmem:[#allocation3 + $0xf0] sm:$0xff] %vm504, %v469
        %536 = vst.msk [vmem:[#allocation3 + $0xf8] sm:$0xff] %vm504, %v471
        %v537 = vld [vmem:[#allocation2 + $0x2] sm:$0xff]
        %v538 = vld [vmem:[#allocation2 + $0xa] sm:$0xff]
        %v539 = vld [vmem:[#allocation2 + $0x1a] sm:$0xff]
        %v540 = vld [vmem:[#allocation2 + $0x22] sm:$0xff]
        %v541 = vld [vmem:[#allocation2 + $0x32] sm:$0xff]
        %v542 = vld [vmem:[#allocation2 + $0x3a] sm:$0xff]
        %v543 = vld [vmem:[#allocation2 + $0x4a] sm:$0xff]
        %v544 = vld [vmem:[#allocation2 + $0x52] sm:$0xff]
        %v545 = vld [vmem:[#allocation2 + $0x62] sm:$0xff]
        %v546 = vld [vmem:[#allocation2 + $0x6a] sm:$0xff]
        %v547 = vld [vmem:[#allocation2 + $0x7a] sm:$0xff]
        %v548 = vld [vmem:[#allocation2 + $0x82] sm:$0xff]
        %v549 = vld [vmem:[#allocation2 + $0x92] sm:$0xff]
        %v550 = vld [vmem:[#allocation2 + $0x9a] sm:$0xff]
        %v551 = vld [vmem:[#allocation2 + $0xaa] sm:$0xff]
        %v552 = vld [vmem:[#allocation2 + $0xb2] sm:$0xff]
        %v553 = vld [vmem:[#allocation2 + $0xc2] sm:$0xff]
        %v554 = vld [vmem:[#allocation2 + $0xca] sm:$0xff]
        %v555 = vld [vmem:[#allocation2 + $0xda] sm:$0xff]
        %v556 = vld [vmem:[#allocation2 + $0xe2] sm:$0xff]
        %v557 = vld [vmem:[#allocation2 + $0xf2] sm:$0xff]
        %v558 = vld [vmem:[#allocation2 + $0xfa] sm:$0xff]
        %v559 = vld [vmem:[#allocation2 + $0x10a] sm:$0xff]
        %v560 = vld [vmem:[#allocation2 + $0x112] sm:$0xff]
        %v561 = vld [vmem:[#allocation2 + $0x122] sm:$0xff]
        %v562 = vld [vmem:[#allocation2 + $0x12a] sm:$0xff]
        %v563 = vld [vmem:[#allocation2 + $0x13a] sm:$0xff]
        %v564 = vld [vmem:[#allocation2 + $0x142] sm:$0xff]
        %v565 = vld [vmem:[#allocation2 + $0x152] sm:$0xff]
        %v566 = vld [vmem:[#allocation2 + $0x15a] sm:$0xff]
        %v567 = vld [vmem:[#allocation2 + $0x16a] sm:$0xff]
        %v568 = vld [vmem:[#allocation2 + $0x172] sm:$0xff]
        %601 = vrot.lane.b32.xlu0 %v537, 8
        %v602 = vpop.permute.xlu0 %601
        %603 = vrot.lane.b32.xlu0 %v538, 8
        %v604 = vpop.permute.xlu0 %603
        %605 = vrot.lane.b32.xlu0 %v539, 8
        %v606 = vpop.permute.xlu0 %605
        %607 = vrot.lane.b32.xlu0 %v540, 8
        %v608 = vpop.permute.xlu0 %607
        %609 = vrot.lane.b32.xlu0 %v541, 8
        %v610 = vpop.permute.xlu0 %609
        %611 = vrot.lane.b32.xlu0 %v542, 8
        %v612 = vpop.permute.xlu0 %611
        %613 = vrot.lane.b32.xlu0 %v543, 8
        %v614 = vpop.permute.xlu0 %613
        %615 = vrot.lane.b32.xlu0 %v544, 8
        %v616 = vpop.permute.xlu0 %615
        %617 = vrot.lane.b32.xlu0 %v545, 8
        %v618 = vpop.permute.xlu0 %617
        %619 = vrot.lane.b32.xlu0 %v546, 8
        %v620 = vpop.permute.xlu0 %619
        %621 = vrot.lane.b32.xlu0 %v547, 8
        %v622 = vpop.permute.xlu0 %621
        %623 = vrot.lane.b32.xlu0 %v548, 8
        %v624 = vpop.permute.xlu0 %623
        %625 = vrot.lane.b32.xlu0 %v549, 8
        %v626 = vpop.permute.xlu0 %625
        %627 = vrot.lane.b32.xlu0 %v550, 8
        %v628 = vpop.permute.xlu0 %627
        %629 = vrot.lane.b32.xlu0 %v551, 8
        %v630 = vpop.permute.xlu0 %629
        %631 = vrot.lane.b32.xlu0 %v552, 8
        %v632 = vpop.permute.xlu0 %631
        %633 = vrot.lane.b32.xlu0 %v553, 8
        %v634 = vpop.permute.xlu0 %633
        %635 = vrot.lane.b32.xlu0 %v554, 8
        %v636 = vpop.permute.xlu0 %635
        %637 = vrot.lane.b32.xlu0 %v555, 8
        %v638 = vpop.permute.xlu0 %637
        %639 = vrot.lane.b32.xlu0 %v556, 8
        %v640 = vpop.permute.xlu0 %639
        %641 = vrot.lane.b32.xlu0 %v557, 8
        %v642 = vpop.permute.xlu0 %641
        %643 = vrot.lane.b32.xlu0 %v558, 8
        %v644 = vpop.permute.xlu0 %643
        %645 = vrot.lane.b32.xlu0 %v559, 8
        %v646 = vpop.permute.xlu0 %645
        %647 = vrot.lane.b32.xlu0 %v560, 8
        %v648 = vpop.permute.xlu0 %647
        %649 = vrot.lane.b32.xlu0 %v561, 8
        %v650 = vpop.permute.xlu0 %649
        %651 = vrot.lane.b32.xlu0 %v562, 8
        %v652 = vpop.permute.xlu0 %651
        %653 = vrot.lane.b32.xlu0 %v563, 8
        %v654 = vpop.permute.xlu0 %653
        %655 = vrot.lane.b32.xlu0 %v564, 8
        %v656 = vpop.permute.xlu0 %655
        %657 = vrot.lane.b32.xlu0 %v565, 8
        %v658 = vpop.permute.xlu0 %657
        %659 = vrot.lane.b32.xlu0 %v566, 8
        %v660 = vpop.permute.xlu0 %659
        %661 = vrot.lane.b32.xlu0 %v567, 8
        %v662 = vpop.permute.xlu0 %661
        %663 = vrot.lane.b32.xlu0 %v568, 8
        %v664 = vpop.permute.xlu0 %663
        %vm697 = vcmask 97344
        %698 = vst.msk [vmem:[#allocation3] sm:$0xff] %vm697, %v602
        %699 = vst.msk [vmem:[#allocation3 + $0x8] sm:$0xff] %vm697, %v604
        %700 = vst.msk [vmem:[#allocation3 + $0x10] sm:$0xff] %vm697, %v606
        %701 = vst.msk [vmem:[#allocation3 + $0x18] sm:$0xff] %vm697, %v608
        %702 = vst.msk [vmem:[#allocation3 + $0x20] sm:$0xff] %vm697, %v610
        %703 = vst.msk [vmem:[#allocation3 + $0x28] sm:$0xff] %vm697, %v612
        %704 = vst.msk [vmem:[#allocation3 + $0x30] sm:$0xff] %vm697, %v614
        %705 = vst.msk [vmem:[#allocation3 + $0x38] sm:$0xff] %vm697, %v616
        %706 = vst.msk [vmem:[#allocation3 + $0x40] sm:$0xff] %vm697, %v618
        %707 = vst.msk [vmem:[#allocation3 + $0x48] sm:$0xff] %vm697, %v620
        %708 = vst.msk [vmem:[#allocation3 + $0x50] sm:$0xff] %vm697, %v622
        %709 = vst.msk [vmem:[#allocation3 + $0x58] sm:$0xff] %vm697, %v624
        %710 = vst.msk [vmem:[#allocation3 + $0x60] sm:$0xff] %vm697, %v626
        %711 = vst.msk [vmem:[#allocation3 + $0x68] sm:$0xff] %vm697, %v628
        %712 = vst.msk [vmem:[#allocation3 + $0x70] sm:$0xff] %vm697, %v630
        %713 = vst.msk [vmem:[#allocation3 + $0x78] sm:$0xff] %vm697, %v632
        %714 = vst.msk [vmem:[#allocation3 + $0x80] sm:$0xff] %vm697, %v634
        %715 = vst.msk [vmem:[#allocation3 + $0x88] sm:$0xff] %vm697, %v636
        %716 = vst.msk [vmem:[#allocation3 + $0x90] sm:$0xff] %vm697, %v638
        %717 = vst.msk [vmem:[#allocation3 + $0x98] sm:$0xff] %vm697, %v640
        %718 = vst.msk [vmem:[#allocation3 + $0xa0] sm:$0xff] %vm697, %v642
        %719 = vst.msk [vmem:[#allocation3 + $0xa8] sm:$0xff] %vm697, %v644
        %720 = vst.msk [vmem:[#allocation3 + $0xb0] sm:$0xff] %vm697, %v646
        %721 = vst.msk [vmem:[#allocation3 + $0xb8] sm:$0xff] %vm697, %v648
        %722 = vst.msk [vmem:[#allocation3 + $0xc0] sm:$0xff] %vm697, %v650
        %723 = vst.msk [vmem:[#allocation3 + $0xc8] sm:$0xff] %vm697, %v652
        %724 = vst.msk [vmem:[#allocation3 + $0xd0] sm:$0xff] %vm697, %v654
        %725 = vst.msk [vmem:[#allocation3 + $0xd8] sm:$0xff] %vm697, %v656
        %726 = vst.msk [vmem:[#allocation3 + $0xe0] sm:$0xff] %vm697, %v658
        %727 = vst.msk [vmem:[#allocation3 + $0xe8] sm:$0xff] %vm697, %v660
        %728 = vst.msk [vmem:[#allocation3 + $0xf0] sm:$0xff] %vm697, %v662
        %729 = vst.msk [vmem:[#allocation3 + $0xf8] sm:$0xff] %vm697, %v664
        %v730 = vld [vmem:[%s247] sm:$0xff]
        %v731 = vld [vmem:[%s247 + $0x8] sm:$0xff]
        %v732 = vld [vmem:[%s247 + $0x18] sm:$0xff]
        %v733 = vld [vmem:[%s247 + $0x20] sm:$0xff]
        %v734 = vld [vmem:[%s247 + $0x30] sm:$0xff]
        %v735 = vld [vmem:[%s247 + $0x38] sm:$0xff]
        %v736 = vld [vmem:[%s247 + $0x48] sm:$0xff]
        %v737 = vld [vmem:[%s247 + $0x50] sm:$0xff]
        %v738 = vld [vmem:[%s247 + $0x60] sm:$0xff]
        %v739 = vld [vmem:[%s247 + $0x68] sm:$0xff]
        %v740 = vld [vmem:[%s247 + $0x78] sm:$0xff]
        %v741 = vld [vmem:[%s247 + $0x80] sm:$0xff]
        %v742 = vld [vmem:[%s247 + $0x90] sm:$0xff]
        %v743 = vld [vmem:[%s247 + $0x98] sm:$0xff]
        %v744 = vld [vmem:[%s247 + $0xa8] sm:$0xff]
        %v745 = vld [vmem:[%s247 + $0xb0] sm:$0xff]
        %v746 = vld [vmem:[%s247 + $0xc0] sm:$0xff]
        %v747 = vld [vmem:[%s247 + $0xc8] sm:$0xff]
        %v748 = vld [vmem:[%s247 + $0xd8] sm:$0xff]
        %v749 = vld [vmem:[%s247 + $0xe0] sm:$0xff]
        %v750 = vld [vmem:[%s247 + $0xf0] sm:$0xff]
        %v751 = vld [vmem:[%s247 + $0xf8] sm:$0xff]
        %v752 = vld [vmem:[%s247 + $0x108] sm:$0xff]
        %v753 = vld [vmem:[%s247 + $0x110] sm:$0xff]
        %v754 = vld [vmem:[%s247 + $0x120] sm:$0xff]
        %v755 = vld [vmem:[%s247 + $0x128] sm:$0xff]
        %v756 = vld [vmem:[%s247 + $0x138] sm:$0xff]
        %v757 = vld [vmem:[%s247 + $0x140] sm:$0xff]
        %v758 = vld [vmem:[%s247 + $0x150] sm:$0xff]
        %v759 = vld [vmem:[%s247 + $0x158] sm:$0xff]
        %v760 = vld [vmem:[%s247 + $0x168] sm:$0xff]
        %v761 = vld [vmem:[%s247 + $0x170] sm:$0xff]
        %794 = vrot.lane.b32.xlu0 %v730, 12
        %v795 = vpop.permute.xlu0 %794
        %796 = vrot.lane.b32.xlu0 %v731, 12
        %v797 = vpop.permute.xlu0 %796
        %798 = vrot.lane.b32.xlu0 %v732, 12
        %v799 = vpop.permute.xlu0 %798
        %800 = vrot.lane.b32.xlu0 %v733, 12
        %v801 = vpop.permute.xlu0 %800
        %802 = vrot.lane.b32.xlu0 %v734, 12
        %v803 = vpop.permute.xlu0 %802
        %804 = vrot.lane.b32.xlu0 %v735, 12
        %v805 = vpop.permute.xlu0 %804
        %806 = vrot.lane.b32.xlu0 %v736, 12
        %v807 = vpop.permute.xlu0 %806
        %808 = vrot.lane.b32.xlu0 %v737, 12
        %v809 = vpop.permute.xlu0 %808
        %810 = vrot.lane.b32.xlu0 %v738, 12
        %v811 = vpop.permute.xlu0 %810
        %812 = vrot.lane.b32.xlu0 %v739, 12
        %v813 = vpop.permute.xlu0 %812
        %814 = vrot.lane.b32.xlu0 %v740, 12
        %v815 = vpop.permute.xlu0 %814
        %816 = vrot.lane.b32.xlu0 %v741, 12
        %v817 = vpop.permute.xlu0 %816
        %818 = vrot.lane.b32.xlu0 %v742, 12
        %v819 = vpop.permute.xlu0 %818
        %820 = vrot.lane.b32.xlu0 %v743, 12
        %v821 = vpop.permute.xlu0 %820
        %822 = vrot.lane.b32.xlu0 %v744, 12
        %v823 = vpop.permute.xlu0 %822
        %824 = vrot.lane.b32.xlu0 %v745, 12
        %v825 = vpop.permute.xlu0 %824
        %826 = vrot.lane.b32.xlu0 %v746, 12
        %v827 = vpop.permute.xlu0 %826
        %828 = vrot.lane.b32.xlu0 %v747, 12
        %v829 = vpop.permute.xlu0 %828
        %830 = vrot.lane.b32.xlu0 %v748, 12
        %v831 = vpop.permute.xlu0 %830
        %832 = vrot.lane.b32.xlu0 %v749, 12
        %v833 = vpop.permute.xlu0 %832
        %834 = vrot.lane.b32.xlu0 %v750, 12
        %v835 = vpop.permute.xlu0 %834
        %836 = vrot.lane.b32.xlu0 %v751, 12
        %v837 = vpop.permute.xlu0 %836
        %838 = vrot.lane.b32.xlu0 %v752, 12
        %v839 = vpop.permute.xlu0 %838
        %840 = vrot.lane.b32.xlu0 %v753, 12
        %v841 = vpop.permute.xlu0 %840
        %842 = vrot.lane.b32.xlu0 %v754, 12
        %v843 = vpop.permute.xlu0 %842
        %844 = vrot.lane.b32.xlu0 %v755, 12
        %v845 = vpop.permute.xlu0 %844
        %846 = vrot.lane.b32.xlu0 %v756, 12
        %v847 = vpop.permute.xlu0 %846
        %848 = vrot.lane.b32.xlu0 %v757, 12
        %v849 = vpop.permute.xlu0 %848
        %850 = vrot.lane.b32.xlu0 %v758, 12
        %v851 = vpop.permute.xlu0 %850
        %852 = vrot.lane.b32.xlu0 %v759, 12
        %v853 = vpop.permute.xlu0 %852
        %854 = vrot.lane.b32.xlu0 %v760, 12
        %v855 = vpop.permute.xlu0 %854
        %856 = vrot.lane.b32.xlu0 %v761, 12
        %v857 = vpop.permute.xlu0 %856
        %vm890 = vcmask 130144
        %891 = vst.msk [vmem:[#allocation3] sm:$0xff] %vm890, %v795
        %892 = vst.msk [vmem:[#allocation3 + $0x8] sm:$0xff] %vm890, %v797
        %893 = vst.msk [vmem:[#allocation3 + $0x10] sm:$0xff] %vm890, %v799
        %894 = vst.msk [vmem:[#allocation3 + $0x18] sm:$0xff] %vm890, %v801
        %895 = vst.msk [vmem:[#allocation3 + $0x20] sm:$0xff] %vm890, %v803
        %896 = vst.msk [vmem:[#allocation3 + $0x28] sm:$0xff] %vm890, %v805
        %897 = vst.msk [vmem:[#allocation3 + $0x30] sm:$0xff] %vm890, %v807
        %898 = vst.msk [vmem:[#allocation3 + $0x38] sm:$0xff] %vm890, %v809
        %899 = vst.msk [vmem:[#allocation3 + $0x40] sm:$0xff] %vm890, %v811
        %900 = vst.msk [vmem:[#allocation3 + $0x48] sm:$0xff] %vm890, %v813
        %901 = vst.msk [vmem:[#allocation3 + $0x50] sm:$0xff] %vm890, %v815
        %902 = vst.msk [vmem:[#allocation3 + $0x58] sm:$0xff] %vm890, %v817
        %903 = vst.msk [vmem:[#allocation3 + $0x60] sm:$0xff] %vm890, %v819
        %904 = vst.msk [vmem:[#allocation3 + $0x68] sm:$0xff] %vm890, %v821
        %905 = vst.msk [vmem:[#allocation3 + $0x70] sm:$0xff] %vm890, %v823
        %906 = vst.msk [vmem:[#allocation3 + $0x78] sm:$0xff] %vm890, %v825
        %907 = vst.msk [vmem:[#allocation3 + $0x80] sm:$0xff] %vm890, %v827
        %908 = vst.msk [vmem:[#allocation3 + $0x88] sm:$0xff] %vm890, %v829
        %909 = vst.msk [vmem:[#allocation3 + $0x90] sm:$0xff] %vm890, %v831
        %910 = vst.msk [vmem:[#allocation3 + $0x98] sm:$0xff] %vm890, %v833
        %911 = vst.msk [vmem:[#allocation3 + $0xa0] sm:$0xff] %vm890, %v835
        %912 = vst.msk [vmem:[#allocation3 + $0xa8] sm:$0xff] %vm890, %v837
        %913 = vst.msk [vmem:[#allocation3 + $0xb0] sm:$0xff] %vm890, %v839
        %914 = vst.msk [vmem:[#allocation3 + $0xb8] sm:$0xff] %vm890, %v841
        %915 = vst.msk [vmem:[#allocation3 + $0xc0] sm:$0xff] %vm890, %v843
        %916 = vst.msk [vmem:[#allocation3 + $0xc8] sm:$0xff] %vm890, %v845
        %917 = vst.msk [vmem:[#allocation3 + $0xd0] sm:$0xff] %vm890, %v847
        %918 = vst.msk [vmem:[#allocation3 + $0xd8] sm:$0xff] %vm890, %v849
        %919 = vst.msk [vmem:[#allocation3 + $0xe0] sm:$0xff] %vm890, %v851
        %920 = vst.msk [vmem:[#allocation3 + $0xe8] sm:$0xff] %vm890, %v853
        %921 = vst.msk [vmem:[#allocation3 + $0xf0] sm:$0xff] %vm890, %v855
        %922 = vst.msk [vmem:[#allocation3 + $0xf8] sm:$0xff] %vm890, %v857
        %v923 = vld [vmem:[%s247 + $0x1] sm:$0xff]
        %v924 = vld [vmem:[%s247 + $0x9] sm:$0xff]
        %v925 = vld [vmem:[%s247 + $0x19] sm:$0xff]
        %v926 = vld [vmem:[%s247 + $0x21] sm:$0xff]
        %v927 = vld [vmem:[%s247 + $0x31] sm:$0xff]
        %v928 = vld [vmem:[%s247 + $0x39] sm:$0xff]
        %v929 = vld [vmem:[%s247 + $0x49] sm:$0xff]
        %v930 = vld [vmem:[%s247 + $0x51] sm:$0xff]
        %v931 = vld [vmem:[%s247 + $0x61] sm:$0xff]
        %v932 = vld [vmem:[%s247 + $0x69] sm:$0xff]
        %v933 = vld [vmem:[%s247 + $0x79] sm:$0xff]
        %v934 = vld [vmem:[%s247 + $0x81] sm:$0xff]
        %v935 = vld [vmem:[%s247 + $0x91] sm:$0xff]
        %v936 = vld [vmem:[%s247 + $0x99] sm:$0xff]
        %v937 = vld [vmem:[%s247 + $0xa9] sm:$0xff]
        %v938 = vld [vmem:[%s247 + $0xb1] sm:$0xff]
        %v939 = vld [vmem:[%s247 + $0xc1] sm:$0xff]
        %v940 = vld [vmem:[%s247 + $0xc9] sm:$0xff]
        %v941 = vld [vmem:[%s247 + $0xd9] sm:$0xff]
        %v942 = vld [vmem:[%s247 + $0xe1] sm:$0xff]
        %v943 = vld [vmem:[%s247 + $0xf1] sm:$0xff]
        %v944 = vld [vmem:[%s247 + $0xf9] sm:$0xff]
        %v945 = vld [vmem:[%s247 + $0x109] sm:$0xff]
        %v946 = vld [vmem:[%s247 + $0x111] sm:$0xff]
        %v947 = vld [vmem:[%s247 + $0x121] sm:$0xff]
        %v948 = vld [vmem:[%s247 + $0x129] sm:$0xff]
        %v949 = vld [vmem:[%s247 + $0x139] sm:$0xff]
        %v950 = vld [vmem:[%s247 + $0x141] sm:$0xff]
        %v951 = vld [vmem:[%s247 + $0x151] sm:$0xff]
        %v952 = vld [vmem:[%s247 + $0x159] sm:$0xff]
        %v953 = vld [vmem:[%s247 + $0x169] sm:$0xff]
        %v954 = vld [vmem:[%s247 + $0x171] sm:$0xff]
        %987 = vrot.lane.b32.xlu0 %v923, 16
        %v988 = vpop.permute.xlu0 %987
        %989 = vrot.lane.b32.xlu0 %v924, 16
        %v990 = vpop.permute.xlu0 %989
        %991 = vrot.lane.b32.xlu0 %v925, 16
        %v992 = vpop.permute.xlu0 %991
        %993 = vrot.lane.b32.xlu0 %v926, 16
        %v994 = vpop.permute.xlu0 %993
        %995 = vrot.lane.b32.xlu0 %v927, 16
        %v996 = vpop.permute.xlu0 %995
        %997 = vrot.lane.b32.xlu0 %v928, 16
        %v998 = vpop.permute.xlu0 %997
        %999 = vrot.lane.b32.xlu0 %v929, 16
        %v1000 = vpop.permute.xlu0 %999
        %1001 = vrot.lane.b32.xlu0 %v930, 16
        %v1002 = vpop.permute.xlu0 %1001
        %1003 = vrot.lane.b32.xlu0 %v931, 16
        %v1004 = vpop.permute.xlu0 %1003
        %1005 = vrot.lane.b32.xlu0 %v932, 16
        %v1006 = vpop.permute.xlu0 %1005
        %1007 = vrot.lane.b32.xlu0 %v933, 16
        %v1008 = vpop.permute.xlu0 %1007
        %1009 = vrot.lane.b32.xlu0 %v934, 16
        %v1010 = vpop.permute.xlu0 %1009
        %1011 = vrot.lane.b32.xlu0 %v935, 16
        %v1012 = vpop.permute.xlu0 %1011
        %1013 = vrot.lane.b32.xlu0 %v936, 16
        %v1014 = vpop.permute.xlu0 %1013
        %1015 = vrot.lane.b32.xlu0 %v937, 16
        %v1016 = vpop.permute.xlu0 %1015
        %1017 = vrot.lane.b32.xlu0 %v938, 16
        %v1018 = vpop.permute.xlu0 %1017
        %1019 = vrot.lane.b32.xlu0 %v939, 16
        %v1020 = vpop.permute.xlu0 %1019
        %1021 = vrot.lane.b32.xlu0 %v940, 16
        %v1022 = vpop.permute.xlu0 %1021
        %1023 = vrot.lane.b32.xlu0 %v941, 16
        %v1024 = vpop.permute.xlu0 %1023
        %1025 = vrot.lane.b32.xlu0 %v942, 16
        %v1026 = vpop.permute.xlu0 %1025
        %1027 = vrot.lane.b32.xlu0 %v943, 16
        %v1028 = vpop.permute.xlu0 %1027
        %1029 = vrot.lane.b32.xlu0 %v944, 16
        %v1030 = vpop.permute.xlu0 %1029
        %1031 = vrot.lane.b32.xlu0 %v945, 16
        %v1032 = vpop.permute.xlu0 %1031
        %1033 = vrot.lane.b32.xlu0 %v946, 16
        %v1034 = vpop.permute.xlu0 %1033
        %1035 = vrot.lane.b32.xlu0 %v947, 16
        %v1036 = vpop.permute.xlu0 %1035
        %1037 = vrot.lane.b32.xlu0 %v948, 16
        %v1038 = vpop.permute.xlu0 %1037
        %1039 = vrot.lane.b32.xlu0 %v949, 16
        %v1040 = vpop.permute.xlu0 %1039
        %1041 = vrot.lane.b32.xlu0 %v950, 16
        %v1042 = vpop.permute.xlu0 %1041
        %1043 = vrot.lane.b32.xlu0 %v951, 16
        %v1044 = vpop.permute.xlu0 %1043
        %1045 = vrot.lane.b32.xlu0 %v952, 16
        %v1046 = vpop.permute.xlu0 %1045
        %1047 = vrot.lane.b32.xlu0 %v953, 16
        %v1048 = vpop.permute.xlu0 %1047
        %1049 = vrot.lane.b32.xlu0 %v954, 16
        %v1050 = vpop.permute.xlu0 %1049
        %vm1083 = vcmask 162944
        %1084 = vst.msk [vmem:[#allocation3] sm:$0xff] %vm1083, %v988
        %1085 = vst.msk [vmem:[#allocation3 + $0x8] sm:$0xff] %vm1083, %v990
        %1086 = vst.msk [vmem:[#allocation3 + $0x10] sm:$0xff] %vm1083, %v992
        %1087 = vst.msk [vmem:[#allocation3 + $0x18] sm:$0xff] %vm1083, %v994
        %1088 = vst.msk [vmem:[#allocation3 + $0x20] sm:$0xff] %vm1083, %v996
        %1089 = vst.msk [vmem:[#allocation3 + $0x28] sm:$0xff] %vm1083, %v998
        %1090 = vst.msk [vmem:[#allocation3 + $0x30] sm:$0xff] %vm1083, %v1000
        %1091 = vst.msk [vmem:[#allocation3 + $0x38] sm:$0xff] %vm1083, %v1002
        %1092 = vst.msk [vmem:[#allocation3 + $0x40] sm:$0xff] %vm1083, %v1004
        %1093 = vst.msk [vmem:[#allocation3 + $0x48] sm:$0xff] %vm1083, %v1006
        %1094 = vst.msk [vmem:[#allocation3 + $0x50] sm:$0xff] %vm1083, %v1008
        %1095 = vst.msk [vmem:[#allocation3 + $0x58] sm:$0xff] %vm1083, %v1010
        %1096 = vst.msk [vmem:[#allocation3 + $0x60] sm:$0xff] %vm1083, %v1012
        %1097 = vst.msk [vmem:[#allocation3 + $0x68] sm:$0xff] %vm1083, %v1014
        %1098 = vst.msk [vmem:[#allocation3 + $0x70] sm:$0xff] %vm1083, %v1016
        %1099 = vst.msk [vmem:[#allocation3 + $0x78] sm:$0xff] %vm1083, %v1018
        %1100 = vst.msk [vmem:[#allocation3 + $0x80] sm:$0xff] %vm1083, %v1020
        %1101 = vst.msk [vmem:[#allocation3 + $0x88] sm:$0xff] %vm1083, %v1022
        %1102 = vst.msk [vmem:[#allocation3 + $0x90] sm:$0xff] %vm1083, %v1024
        %1103 = vst.msk [vmem:[#allocation3 + $0x98] sm:$0xff] %vm1083, %v1026
        %1104 = vst.msk [vmem:[#allocation3 + $0xa0] sm:$0xff] %vm1083, %v1028
        %1105 = vst.msk [vmem:[#allocation3 + $0xa8] sm:$0xff] %vm1083, %v1030
        %1106 = vst.msk [vmem:[#allocation3 + $0xb0] sm:$0xff] %vm1083, %v1032
        %1107 = vst.msk [vmem:[#allocation3 + $0xb8] sm:$0xff] %vm1083, %v1034
        %1108 = vst.msk [vmem:[#allocation3 + $0xc0] sm:$0xff] %vm1083, %v1036
        %1109 = vst.msk [vmem:[#allocation3 + $0xc8] sm:$0xff] %vm1083, %v1038
        %1110 = vst.msk [vmem:[#allocation3 + $0xd0] sm:$0xff] %vm1083, %v1040
        %1111 = vst.msk [vmem:[#allocation3 + $0xd8] sm:$0xff] %vm1083, %v1042
        %1112 = vst.msk [vmem:[#allocation3 + $0xe0] sm:$0xff] %vm1083, %v1044
        %1113 = vst.msk [vmem:[#allocation3 + $0xe8] sm:$0xff] %vm1083, %v1046
        %1114 = vst.msk [vmem:[#allocation3 + $0xf0] sm:$0xff] %vm1083, %v1048
        %1115 = vst.msk [vmem:[#allocation3 + $0xf8] sm:$0xff] %vm1083, %v1050
        %v1116 = vld [vmem:[%s247 + $0x2] sm:$0xff]
        %v1117 = vld [vmem:[%s247 + $0xa] sm:$0xff]
        %v1118 = vld [vmem:[%s247 + $0x1a] sm:$0xff]
        %v1119 = vld [vmem:[%s247 + $0x22] sm:$0xff]
        %v1120 = vld [vmem:[%s247 + $0x32] sm:$0xff]
        %v1121 = vld [vmem:[%s247 + $0x3a] sm:$0xff]
        %v1122 = vld [vmem:[%s247 + $0x4a] sm:$0xff]
        %v1123 = vld [vmem:[%s247 + $0x52] sm:$0xff]
        %v1124 = vld [vmem:[%s247 + $0x62] sm:$0xff]
        %v1125 = vld [vmem:[%s247 + $0x6a] sm:$0xff]
        %v1126 = vld [vmem:[%s247 + $0x7a] sm:$0xff]
        %v1127 = vld [vmem:[%s247 + $0x82] sm:$0xff]
        %v1128 = vld [vmem:[%s247 + $0x92] sm:$0xff]
        %v1129 = vld [vmem:[%s247 + $0x9a] sm:$0xff]
        %v1130 = vld [vmem:[%s247 + $0xaa] sm:$0xff]
        %v1131 = vld [vmem:[%s247 + $0xb2] sm:$0xff]
        %v1132 = vld [vmem:[%s247 + $0xc2] sm:$0xff]
        %v1133 = vld [vmem:[%s247 + $0xca] sm:$0xff]
        %v1134 = vld [vmem:[%s247 + $0xda] sm:$0xff]
        %v1135 = vld [vmem:[%s247 + $0xe2] sm:$0xff]
        %v1136 = vld [vmem:[%s247 + $0xf2] sm:$0xff]
        %v1137 = vld [vmem:[%s247 + $0xfa] sm:$0xff]
        %v1138 = vld [vmem:[%s247 + $0x10a] sm:$0xff]
        %v1139 = vld [vmem:[%s247 + $0x112] sm:$0xff]
        %v1140 = vld [vmem:[%s247 + $0x122] sm:$0xff]
        %v1141 = vld [vmem:[%s247 + $0x12a] sm:$0xff]
        %v1142 = vld [vmem:[%s247 + $0x13a] sm:$0xff]
        %v1143 = vld [vmem:[%s247 + $0x142] sm:$0xff]
        %v1144 = vld [vmem:[%s247 + $0x152] sm:$0xff]
        %v1145 = vld [vmem:[%s247 + $0x15a] sm:$0xff]
        %v1146 = vld [vmem:[%s247 + $0x16a] sm:$0xff]
        %v1147 = vld [vmem:[%s247 + $0x172] sm:$0xff]
        %1180 = vrot.lane.b32.xlu0 %v1116, 20
        %v1181 = vpop.permute.xlu0 %1180
        %1182 = vrot.lane.b32.xlu0 %v1117, 20
        %v1183 = vpop.permute.xlu0 %1182
        %1184 = vrot.lane.b32.xlu0 %v1118, 20
        %v1185 = vpop.permute.xlu0 %1184
        %1186 = vrot.lane.b32.xlu0 %v1119, 20
        %v1187 = vpop.permute.xlu0 %1186
        %1188 = vrot.lane.b32.xlu0 %v1120, 20
        %v1189 = vpop.permute.xlu0 %1188
        %1190 = vrot.lane.b32.xlu0 %v1121, 20
        %v1191 = vpop.permute.xlu0 %1190
        %1192 = vrot.lane.b32.xlu0 %v1122, 20
        %v1193 = vpop.permute.xlu0 %1192
        %1194 = vrot.lane.b32.xlu0 %v1123, 20
        %v1195 = vpop.permute.xlu0 %1194
        %1196 = vrot.lane.b32.xlu0 %v1124, 20
        %v1197 = vpop.permute.xlu0 %1196
        %1198 = vrot.lane.b32.xlu0 %v1125, 20
        %v1199 = vpop.permute.xlu0 %1198
        %1200 = vrot.lane.b32.xlu0 %v1126, 20
        %v1201 = vpop.permute.xlu0 %1200
        %1202 = vrot.lane.b32.xlu0 %v1127, 20
        %v1203 = vpop.permute.xlu0 %1202
        %1204 = vrot.lane.b32.xlu0 %v1128, 20
        %v1205 = vpop.permute.xlu0 %1204
        %1206 = vrot.lane.b32.xlu0 %v1129, 20
        %v1207 = vpop.permute.xlu0 %1206
        %1208 = vrot.lane.b32.xlu0 %v1130, 20
        %v1209 = vpop.permute.xlu0 %1208
        %1210 = vrot.lane.b32.xlu0 %v1131, 20
        %v1211 = vpop.permute.xlu0 %1210
        %1212 = vrot.lane.b32.xlu0 %v1132, 20
        %v1213 = vpop.permute.xlu0 %1212
        %1214 = vrot.lane.b32.xlu0 %v1133, 20
        %v1215 = vpop.permute.xlu0 %1214
        %1216 = vrot.lane.b32.xlu0 %v1134, 20
        %v1217 = vpop.permute.xlu0 %1216
        %1218 = vrot.lane.b32.xlu0 %v1135, 20
        %v1219 = vpop.permute.xlu0 %1218
        %1220 = vrot.lane.b32.xlu0 %v1136, 20
        %v1221 = vpop.permute.xlu0 %1220
        %1222 = vrot.lane.b32.xlu0 %v1137, 20
        %v1223 = vpop.permute.xlu0 %1222
        %1224 = vrot.lane.b32.xlu0 %v1138, 20
        %v1225 = vpop.permute.xlu0 %1224
        %1226 = vrot.lane.b32.xlu0 %v1139, 20
        %v1227 = vpop.permute.xlu0 %1226
        %1228 = vrot.lane.b32.xlu0 %v1140, 20
        %v1229 = vpop.permute.xlu0 %1228
        %1230 = vrot.lane.b32.xlu0 %v1141, 20
        %v1231 = vpop.permute.xlu0 %1230
        %1232 = vrot.lane.b32.xlu0 %v1142, 20
        %v1233 = vpop.permute.xlu0 %1232
        %1234 = vrot.lane.b32.xlu0 %v1143, 20
        %v1235 = vpop.permute.xlu0 %1234
        %1236 = vrot.lane.b32.xlu0 %v1144, 20
        %v1237 = vpop.permute.xlu0 %1236
        %1238 = vrot.lane.b32.xlu0 %v1145, 20
        %v1239 = vpop.permute.xlu0 %1238
        %1240 = vrot.lane.b32.xlu0 %v1146, 20
        %v1241 = vpop.permute.xlu0 %1240
        %1242 = vrot.lane.b32.xlu0 %v1147, 20
        %v1243 = vpop.permute.xlu0 %1242
        %vm1276 = vcmask 195744
        %1277 = vst.msk [vmem:[#allocation3] sm:$0xff] %vm1276, %v1181
        %1278 = vst.msk [vmem:[#allocation3 + $0x8] sm:$0xff] %vm1276, %v1183
        %1279 = vst.msk [vmem:[#allocation3 + $0x10] sm:$0xff] %vm1276, %v1185
        %1280 = vst.msk [vmem:[#allocation3 + $0x18] sm:$0xff] %vm1276, %v1187
        %1281 = vst.msk [vmem:[#allocation3 + $0x20] sm:$0xff] %vm1276, %v1189
        %1282 = vst.msk [vmem:[#allocation3 + $0x28] sm:$0xff] %vm1276, %v1191
        %1283 = vst.msk [vmem:[#allocation3 + $0x30] sm:$0xff] %vm1276, %v1193
        %1284 = vst.msk [vmem:[#allocation3 + $0x38] sm:$0xff] %vm1276, %v1195
        %1285 = vst.msk [vmem:[#allocation3 + $0x40] sm:$0xff] %vm1276, %v1197
        %1286 = vst.msk [vmem:[#allocation3 + $0x48] sm:$0xff] %vm1276, %v1199
        %1287 = vst.msk [vmem:[#allocation3 + $0x50] sm:$0xff] %vm1276, %v1201
        %1288 = vst.msk [vmem:[#allocation3 + $0x58] sm:$0xff] %vm1276, %v1203
        %1289 = vst.msk [vmem:[#allocation3 + $0x60] sm:$0xff] %vm1276, %v1205
        %1290 = vst.msk [vmem:[#allocation3 + $0x68] sm:$0xff] %vm1276, %v1207
        %1291 = vst.msk [vmem:[#allocation3 + $0x70] sm:$0xff] %vm1276, %v1209
        %1292 = vst.msk [vmem:[#allocation3 + $0x78] sm:$0xff] %vm1276, %v1211
        %1293 = vst.msk [vmem:[#allocation3 + $0x80] sm:$0xff] %vm1276, %v1213
        %1294 = vst.msk [vmem:[#allocation3 + $0x88] sm:$0xff] %vm1276, %v1215
        %1295 = vst.msk [vmem:[#allocation3 + $0x90] sm:$0xff] %vm1276, %v1217
        %1296 = vst.msk [vmem:[#allocation3 + $0x98] sm:$0xff] %vm1276, %v1219
        %1297 = vst.msk [vmem:[#allocation3 + $0xa0] sm:$0xff] %vm1276, %v1221
        %1298 = vst.msk [vmem:[#allocation3 + $0xa8] sm:$0xff] %vm1276, %v1223
        %1299 = vst.msk [vmem:[#allocation3 + $0xb0] sm:$0xff] %vm1276, %v1225
        %1300 = vst.msk [vmem:[#allocation3 + $0xb8] sm:$0xff] %vm1276, %v1227
        %1301 = vst.msk [vmem:[#allocation3 + $0xc0] sm:$0xff] %vm1276, %v1229
        %1302 = vst.msk [vmem:[#allocation3 + $0xc8] sm:$0xff] %vm1276, %v1231
        %1303 = vst.msk [vmem:[#allocation3 + $0xd0] sm:$0xff] %vm1276, %v1233
        %1304 = vst.msk [vmem:[#allocation3 + $0xd8] sm:$0xff] %vm1276, %v1235
        %1305 = vst.msk [vmem:[#allocation3 + $0xe0] sm:$0xff] %vm1276, %v1237
        %1306 = vst.msk [vmem:[#allocation3 + $0xe8] sm:$0xff] %vm1276, %v1239
        %1307 = vst.msk [vmem:[#allocation3 + $0xf0] sm:$0xff] %vm1276, %v1241
        %1308 = vst.msk [vmem:[#allocation3 + $0xf8] sm:$0xff] %vm1276, %v1243
        %s1309 = scalar_lea.vmem [#allocation2], 48
        %v1310 = vld [vmem:[%s1309] sm:$0xff]
        %v1311 = vld [vmem:[%s1309 + $0x8] sm:$0xff]
        %v1312 = vld [vmem:[%s1309 + $0x18] sm:$0xff]
        %v1313 = vld [vmem:[%s1309 + $0x20] sm:$0xff]
        %v1314 = vld [vmem:[%s1309 + $0x30] sm:$0xff]
        %v1315 = vld [vmem:[%s1309 + $0x38] sm:$0xff]
        %v1316 = vld [vmem:[%s1309 + $0x48] sm:$0xff]
        %v1317 = vld [vmem:[%s1309 + $0x50] sm:$0xff]
        %v1318 = vld [vmem:[%s1309 + $0x60] sm:$0xff]
        %v1319 = vld [vmem:[%s1309 + $0x68] sm:$0xff]
        %v1320 = vld [vmem:[%s1309 + $0x78] sm:$0xff]
        %v1321 = vld [vmem:[%s1309 + $0x80] sm:$0xff]
        %v1322 = vld [vmem:[%s1309 + $0x90] sm:$0xff]
        %v1323 = vld [vmem:[%s1309 + $0x98] sm:$0xff]
        %v1324 = vld [vmem:[%s1309 + $0xa8] sm:$0xff]
        %v1325 = vld [vmem:[%s1309 + $0xb0] sm:$0xff]
        %v1326 = vld [vmem:[%s1309 + $0xc0] sm:$0xff]
        %v1327 = vld [vmem:[%s1309 + $0xc8] sm:$0xff]
        %v1328 = vld [vmem:[%s1309 + $0xd8] sm:$0xff]
        %v1329 = vld [vmem:[%s1309 + $0xe0] sm:$0xff]
        %v1330 = vld [vmem:[%s1309 + $0xf0] sm:$0xff]
        %v1331 = vld [vmem:[%s1309 + $0xf8] sm:$0xff]
        %v1332 = vld [vmem:[%s1309 + $0x108] sm:$0xff]
        %v1333 = vld [vmem:[%s1309 + $0x110] sm:$0xff]
        %v1334 = vld [vmem:[%s1309 + $0x120] sm:$0xff]
        %v1335 = vld [vmem:[%s1309 + $0x128] sm:$0xff]
        %v1336 = vld [vmem:[%s1309 + $0x138] sm:$0xff]
        %v1337 = vld [vmem:[%s1309 + $0x140] sm:$0xff]
        %v1338 = vld [vmem:[%s1309 + $0x150] sm:$0xff]
        %v1339 = vld [vmem:[%s1309 + $0x158] sm:$0xff]
        %v1340 = vld [vmem:[%s1309 + $0x168] sm:$0xff]
        %v1341 = vld [vmem:[%s1309 + $0x170] sm:$0xff]
        %1374 = vrot.lane.b32.xlu0 %v1310, 24
        %v1375 = vpop.permute.xlu0 %1374
        %1376 = vrot.lane.b32.xlu0 %v1311, 24
        %v1377 = vpop.permute.xlu0 %1376
        %1378 = vrot.lane.b32.xlu0 %v1312, 24
        %v1379 = vpop.permute.xlu0 %1378
        %1380 = vrot.lane.b32.xlu0 %v1313, 24
        %v1381 = vpop.permute.xlu0 %1380
        %1382 = vrot.lane.b32.xlu0 %v1314, 24
        %v1383 = vpop.permute.xlu0 %1382
        %1384 = vrot.lane.b32.xlu0 %v1315, 24
        %v1385 = vpop.permute.xlu0 %1384
        %1386 = vrot.lane.b32.xlu0 %v1316, 24
        %v1387 = vpop.permute.xlu0 %1386
        %1388 = vrot.lane.b32.xlu0 %v1317, 24
        %v1389 = vpop.permute.xlu0 %1388
        %1390 = vrot.lane.b32.xlu0 %v1318, 24
        %v1391 = vpop.permute.xlu0 %1390
        %1392 = vrot.lane.b32.xlu0 %v1319, 24
        %v1393 = vpop.permute.xlu0 %1392
        %1394 = vrot.lane.b32.xlu0 %v1320, 24
        %v1395 = vpop.permute.xlu0 %1394
        %1396 = vrot.lane.b32.xlu0 %v1321, 24
        %v1397 = vpop.permute.xlu0 %1396
        %1398 = vrot.lane.b32.xlu0 %v1322, 24
        %v1399 = vpop.permute.xlu0 %1398
        %1400 = vrot.lane.b32.xlu0 %v1323, 24
        %v1401 = vpop.permute.xlu0 %1400
        %1402 = vrot.lane.b32.xlu0 %v1324, 24
        %v1403 = vpop.permute.xlu0 %1402
        %1404 = vrot.lane.b32.xlu0 %v1325, 24
        %v1405 = vpop.permute.xlu0 %1404
        %1406 = vrot.lane.b32.xlu0 %v1326, 24
        %v1407 = vpop.permute.xlu0 %1406
        %1408 = vrot.lane.b32.xlu0 %v1327, 24
        %v1409 = vpop.permute.xlu0 %1408
        %1410 = vrot.lane.b32.xlu0 %v1328, 24
        %v1411 = vpop.permute.xlu0 %1410
        %1412 = vrot.lane.b32.xlu0 %v1329, 24
        %v1413 = vpop.permute.xlu0 %1412
        %1414 = vrot.lane.b32.xlu0 %v1330, 24
        %v1415 = vpop.permute.xlu0 %1414
        %1416 = vrot.lane.b32.xlu0 %v1331, 24
        %v1417 = vpop.permute.xlu0 %1416
        %1418 = vrot.lane.b32.xlu0 %v1332, 24
        %v1419 = vpop.permute.xlu0 %1418
        %1420 = vrot.lane.b32.xlu0 %v1333, 24
        %v1421 = vpop.permute.xlu0 %1420
        %1422 = vrot.lane.b32.xlu0 %v1334, 24
        %v1423 = vpop.permute.xlu0 %1422
        %1424 = vrot.lane.b32.xlu0 %v1335, 24
        %v1425 = vpop.permute.xlu0 %1424
        %1426 = vrot.lane.b32.xlu0 %v1336, 24
        %v1427 = vpop.permute.xlu0 %1426
        %1428 = vrot.lane.b32.xlu0 %v1337, 24
        %v1429 = vpop.permute.xlu0 %1428
        %1430 = vrot.lane.b32.xlu0 %v1338, 24
        %v1431 = vpop.permute.xlu0 %1430
        %1432 = vrot.lane.b32.xlu0 %v1339, 24
        %v1433 = vpop.permute.xlu0 %1432
        %1434 = vrot.lane.b32.xlu0 %v1340, 24
        %v1435 = vpop.permute.xlu0 %1434
        %1436 = vrot.lane.b32.xlu0 %v1341, 24
        %v1437 = vpop.permute.xlu0 %1436
        %vm1470 = vcmask 228544
        %1471 = vst.msk [vmem:[#allocation3] sm:$0xff] %vm1470, %v1375
        %1472 = vst.msk [vmem:[#allocation3 + $0x8] sm:$0xff] %vm1470, %v1377
        %1473 = vst.msk [vmem:[#allocation3 + $0x10] sm:$0xff] %vm1470, %v1379
        %1474 = vst.msk [vmem:[#allocation3 + $0x18] sm:$0xff] %vm1470, %v1381
        %1475 = vst.msk [vmem:[#allocation3 + $0x20] sm:$0xff] %vm1470, %v1383
        %1476 = vst.msk [vmem:[#allocation3 + $0x28] sm:$0xff] %vm1470, %v1385
        %1477 = vst.msk [vmem:[#allocation3 + $0x30] sm:$0xff] %vm1470, %v1387
        %1478 = vst.msk [vmem:[#allocation3 + $0x38] sm:$0xff] %vm1470, %v1389
        %1479 = vst.msk [vmem:[#allocation3 + $0x40] sm:$0xff] %vm1470, %v1391
        %1480 = vst.msk [vmem:[#allocation3 + $0x48] sm:$0xff] %vm1470, %v1393
        %1481 = vst.msk [vmem:[#allocation3 + $0x50] sm:$0xff] %vm1470, %v1395
        %1482 = vst.msk [vmem:[#allocation3 + $0x58] sm:$0xff] %vm1470, %v1397
        %1483 = vst.msk [vmem:[#allocation3 + $0x60] sm:$0xff] %vm1470, %v1399
        %1484 = vst.msk [vmem:[#allocation3 + $0x68] sm:$0xff] %vm1470, %v1401
        %1485 = vst.msk [vmem:[#allocation3 + $0x70] sm:$0xff] %vm1470, %v1403
        %1486 = vst.msk [vmem:[#allocation3 + $0x78] sm:$0xff] %vm1470, %v1405
        %1487 = vst.msk [vmem:[#allocation3 + $0x80] sm:$0xff] %vm1470, %v1407
        %1488 = vst.msk [vmem:[#allocation3 + $0x88] sm:$0xff] %vm1470, %v1409
        %1489 = vst.msk [vmem:[#allocation3 + $0x90] sm:$0xff] %vm1470, %v1411
        %1490 = vst.msk [vmem:[#allocation3 + $0x98] sm:$0xff] %vm1470, %v1413
        %1491 = vst.msk [vmem:[#allocation3 + $0xa0] sm:$0xff] %vm1470, %v1415
        %1492 = vst.msk [vmem:[#allocation3 + $0xa8] sm:$0xff] %vm1470, %v1417
        %1493 = vst.msk [vmem:[#allocation3 + $0xb0] sm:$0xff] %vm1470, %v1419
        %1494 = vst.msk [vmem:[#allocation3 + $0xb8] sm:$0xff] %vm1470, %v1421
        %1495 = vst.msk [vmem:[#allocation3 + $0xc0] sm:$0xff] %vm1470, %v1423
        %1496 = vst.msk [vmem:[#allocation3 + $0xc8] sm:$0xff] %vm1470, %v1425
        %1497 = vst.msk [vmem:[#allocation3 + $0xd0] sm:$0xff] %vm1470, %v1427
        %1498 = vst.msk [vmem:[#allocation3 + $0xd8] sm:$0xff] %vm1470, %v1429
        %1499 = vst.msk [vmem:[#allocation3 + $0xe0] sm:$0xff] %vm1470, %v1431
        %1500 = vst.msk [vmem:[#allocation3 + $0xe8] sm:$0xff] %vm1470, %v1433
        %1501 = vst.msk [vmem:[#allocation3 + $0xf0] sm:$0xff] %vm1470, %v1435
        %1502 = vst.msk [vmem:[#allocation3 + $0xf8] sm:$0xff] %vm1470, %v1437
        %v1503 = vld [vmem:[%s1309 + $0x1] sm:$0xff]
        %v1504 = vld [vmem:[%s1309 + $0x9] sm:$0xff]
        %v1505 = vld [vmem:[%s1309 + $0x19] sm:$0xff]
        %v1506 = vld [vmem:[%s1309 + $0x21] sm:$0xff]
        %v1507 = vld [vmem:[%s1309 + $0x31] sm:$0xff]
        %v1508 = vld [vmem:[%s1309 + $0x39] sm:$0xff]
        %v1509 = vld [vmem:[%s1309 + $0x49] sm:$0xff]
        %v1510 = vld [vmem:[%s1309 + $0x51] sm:$0xff]
        %v1511 = vld [vmem:[%s1309 + $0x61] sm:$0xff]
        %v1512 = vld [vmem:[%s1309 + $0x69] sm:$0xff]
        %v1513 = vld [vmem:[%s1309 + $0x79] sm:$0xff]
        %v1514 = vld [vmem:[%s1309 + $0x81] sm:$0xff]
        %v1515 = vld [vmem:[%s1309 + $0x91] sm:$0xff]
        %v1516 = vld [vmem:[%s1309 + $0x99] sm:$0xff]
        %v1517 = vld [vmem:[%s1309 + $0xa9] sm:$0xff]
        %v1518 = vld [vmem:[%s1309 + $0xb1] sm:$0xff]
        %v1519 = vld [vmem:[%s1309 + $0xc1] sm:$0xff]
        %v1520 = vld [vmem:[%s1309 + $0xc9] sm:$0xff]
        %v1521 = vld [vmem:[%s1309 + $0xd9] sm:$0xff]
        %v1522 = vld [vmem:[%s1309 + $0xe1] sm:$0xff]
        %v1523 = vld [vmem:[%s1309 + $0xf1] sm:$0xff]
        %v1524 = vld [vmem:[%s1309 + $0xf9] sm:$0xff]
        %v1525 = vld [vmem:[%s1309 + $0x109] sm:$0xff]
        %v1526 = vld [vmem:[%s1309 + $0x111] sm:$0xff]
        %v1527 = vld [vmem:[%s1309 + $0x121] sm:$0xff]
        %v1528 = vld [vmem:[%s1309 + $0x129] sm:$0xff]
        %v1529 = vld [vmem:[%s1309 + $0x139] sm:$0xff]
        %v1530 = vld [vmem:[%s1309 + $0x141] sm:$0xff]
        %v1531 = vld [vmem:[%s1309 + $0x151] sm:$0xff]
        %v1532 = vld [vmem:[%s1309 + $0x159] sm:$0xff]
        %v1533 = vld [vmem:[%s1309 + $0x169] sm:$0xff]
        %v1534 = vld [vmem:[%s1309 + $0x171] sm:$0xff]
        %1567 = vrot.lane.b32.xlu0 %v1503, 28
        %v1568 = vpop.permute.xlu0 %1567
        %1569 = vrot.lane.b32.xlu0 %v1504, 28
        %v1570 = vpop.permute.xlu0 %1569
        %1571 = vrot.lane.b32.xlu0 %v1505, 28
        %v1572 = vpop.permute.xlu0 %1571
        %1573 = vrot.lane.b32.xlu0 %v1506, 28
        %v1574 = vpop.permute.xlu0 %1573
        %1575 = vrot.lane.b32.xlu0 %v1507, 28
        %v1576 = vpop.permute.xlu0 %1575
        %1577 = vrot.lane.b32.xlu0 %v1508, 28
        %v1578 = vpop.permute.xlu0 %1577
        %1579 = vrot.lane.b32.xlu0 %v1509, 28
        %v1580 = vpop.permute.xlu0 %1579
        %1581 = vrot.lane.b32.xlu0 %v1510, 28
        %v1582 = vpop.permute.xlu0 %1581
        %1583 = vrot.lane.b32.xlu0 %v1511, 28
        %v1584 = vpop.permute.xlu0 %1583
        %1585 = vrot.lane.b32.xlu0 %v1512, 28
        %v1586 = vpop.permute.xlu0 %1585
        %1587 = vrot.lane.b32.xlu0 %v1513, 28
        %v1588 = vpop.permute.xlu0 %1587
        %1589 = vrot.lane.b32.xlu0 %v1514, 28
        %v1590 = vpop.permute.xlu0 %1589
        %1591 = vrot.lane.b32.xlu0 %v1515, 28
        %v1592 = vpop.permute.xlu0 %1591
        %1593 = vrot.lane.b32.xlu0 %v1516, 28
        %v1594 = vpop.permute.xlu0 %1593
        %1595 = vrot.lane.b32.xlu0 %v1517, 28
        %v1596 = vpop.permute.xlu0 %1595
        %1597 = vrot.lane.b32.xlu0 %v1518, 28
        %v1598 = vpop.permute.xlu0 %1597
        %1599 = vrot.lane.b32.xlu0 %v1519, 28
        %v1600 = vpop.permute.xlu0 %1599
        %1601 = vrot.lane.b32.xlu0 %v1520, 28
        %v1602 = vpop.permute.xlu0 %1601
        %1603 = vrot.lane.b32.xlu0 %v1521, 28
        %v1604 = vpop.permute.xlu0 %1603
        %1605 = vrot.lane.b32.xlu0 %v1522, 28
        %v1606 = vpop.permute.xlu0 %1605
        %1607 = vrot.lane.b32.xlu0 %v1523, 28
        %v1608 = vpop.permute.xlu0 %1607
        %1609 = vrot.lane.b32.xlu0 %v1524, 28
        %v1610 = vpop.permute.xlu0 %1609
        %1611 = vrot.lane.b32.xlu0 %v1525, 28
        %v1612 = vpop.permute.xlu0 %1611
        %1613 = vrot.lane.b32.xlu0 %v1526, 28
        %v1614 = vpop.permute.xlu0 %1613
        %1615 = vrot.lane.b32.xlu0 %v1527, 28
        %v1616 = vpop.permute.xlu0 %1615
        %1617 = vrot.lane.b32.xlu0 %v1528, 28
        %v1618 = vpop.permute.xlu0 %1617
        %1619 = vrot.lane.b32.xlu0 %v1529, 28
        %v1620 = vpop.permute.xlu0 %1619
        %1621 = vrot.lane.b32.xlu0 %v1530, 28
        %v1622 = vpop.permute.xlu0 %1621
        %1623 = vrot.lane.b32.xlu0 %v1531, 28
        %v1624 = vpop.permute.xlu0 %1623
        %1625 = vrot.lane.b32.xlu0 %v1532, 28
        %v1626 = vpop.permute.xlu0 %1625
        %1627 = vrot.lane.b32.xlu0 %v1533, 28
        %v1628 = vpop.permute.xlu0 %1627
        %1629 = vrot.lane.b32.xlu0 %v1534, 28
        %v1630 = vpop.permute.xlu0 %1629
        %vm1663 = vcmask 261344
        %1664 = vst.msk [vmem:[#allocation3] sm:$0xff] %vm1663, %v1568
        %1665 = vst.msk [vmem:[#allocation3 + $0x8] sm:$0xff] %vm1663, %v1570
        %1666 = vst.msk [vmem:[#allocation3 + $0x10] sm:$0xff] %vm1663, %v1572
        %1667 = vst.msk [vmem:[#allocation3 + $0x18] sm:$0xff] %vm1663, %v1574
        %1668 = vst.msk [vmem:[#allocation3 + $0x20] sm:$0xff] %vm1663, %v1576
        %1669 = vst.msk [vmem:[#allocation3 + $0x28] sm:$0xff] %vm1663, %v1578
        %1670 = vst.msk [vmem:[#allocation3 + $0x30] sm:$0xff] %vm1663, %v1580
        %1671 = vst.msk [vmem:[#allocation3 + $0x38] sm:$0xff] %vm1663, %v1582
        %1672 = vst.msk [vmem:[#allocation3 + $0x40] sm:$0xff] %vm1663, %v1584
        %1673 = vst.msk [vmem:[#allocation3 + $0x48] sm:$0xff] %vm1663, %v1586
        %1674 = vst.msk [vmem:[#allocation3 + $0x50] sm:$0xff] %vm1663, %v1588
        %1675 = vst.msk [vmem:[#allocation3 + $0x58] sm:$0xff] %vm1663, %v1590
        %1676 = vst.msk [vmem:[#allocation3 + $0x60] sm:$0xff] %vm1663, %v1592
        %1677 = vst.msk [vmem:[#allocation3 + $0x68] sm:$0xff] %vm1663, %v1594
        %1678 = vst.msk [vmem:[#allocation3 + $0x70] sm:$0xff] %vm1663, %v1596
        %1679 = vst.msk [vmem:[#allocation3 + $0x78] sm:$0xff] %vm1663, %v1598
        %1680 = vst.msk [vmem:[#allocation3 + $0x80] sm:$0xff] %vm1663, %v1600
        %1681 = vst.msk [vmem:[#allocation3 + $0x88] sm:$0xff] %vm1663, %v1602
        %1682 = vst.msk [vmem:[#allocation3 + $0x90] sm:$0xff] %vm1663, %v1604
        %1683 = vst.msk [vmem:[#allocation3 + $0x98] sm:$0xff] %vm1663, %v1606
        %1684 = vst.msk [vmem:[#allocation3 + $0xa0] sm:$0xff] %vm1663, %v1608
        %1685 = vst.msk [vmem:[#allocation3 + $0xa8] sm:$0xff] %vm1663, %v1610
        %1686 = vst.msk [vmem:[#allocation3 + $0xb0] sm:$0xff] %vm1663, %v1612
        %1687 = vst.msk [vmem:[#allocation3 + $0xb8] sm:$0xff] %vm1663, %v1614
        %1688 = vst.msk [vmem:[#allocation3 + $0xc0] sm:$0xff] %vm1663, %v1616
        %1689 = vst.msk [vmem:[#allocation3 + $0xc8] sm:$0xff] %vm1663, %v1618
        %1690 = vst.msk [vmem:[#allocation3 + $0xd0] sm:$0xff] %vm1663, %v1620
        %1691 = vst.msk [vmem:[#allocation3 + $0xd8] sm:$0xff] %vm1663, %v1622
        %1692 = vst.msk [vmem:[#allocation3 + $0xe0] sm:$0xff] %vm1663, %v1624
        %1693 = vst.msk [vmem:[#allocation3 + $0xe8] sm:$0xff] %vm1663, %v1626
        %1694 = vst.msk [vmem:[#allocation3 + $0xf0] sm:$0xff] %vm1663, %v1628
        %1695 = vst.msk [vmem:[#allocation3 + $0xf8] sm:$0xff] %vm1663, %v1630
        %v1696 = vld [vmem:[%s1309 + $0x2] sm:$0xff]
        %v1697 = vld [vmem:[%s1309 + $0xa] sm:$0xff]
        %v1698 = vld [vmem:[%s1309 + $0x1a] sm:$0xff]
        %v1699 = vld [vmem:[%s1309 + $0x22] sm:$0xff]
        %v1700 = vld [vmem:[%s1309 + $0x32] sm:$0xff]
        %v1701 = vld [vmem:[%s1309 + $0x3a] sm:$0xff]
        %v1702 = vld [vmem:[%s1309 + $0x4a] sm:$0xff]
        %v1703 = vld [vmem:[%s1309 + $0x52] sm:$0xff]
        %v1704 = vld [vmem:[%s1309 + $0x62] sm:$0xff]
        %v1705 = vld [vmem:[%s1309 + $0x6a] sm:$0xff]
        %v1706 = vld [vmem:[%s1309 + $0x7a] sm:$0xff]
        %v1707 = vld [vmem:[%s1309 + $0x82] sm:$0xff]
        %v1708 = vld [vmem:[%s1309 + $0x92] sm:$0xff]
        %v1709 = vld [vmem:[%s1309 + $0x9a] sm:$0xff]
        %v1710 = vld [vmem:[%s1309 + $0xaa] sm:$0xff]
        %v1711 = vld [vmem:[%s1309 + $0xb2] sm:$0xff]
        %v1712 = vld [vmem:[%s1309 + $0xc2] sm:$0xff]
        %v1713 = vld [vmem:[%s1309 + $0xca] sm:$0xff]
        %v1714 = vld [vmem:[%s1309 + $0xda] sm:$0xff]
        %v1715 = vld [vmem:[%s1309 + $0xe2] sm:$0xff]
        %v1716 = vld [vmem:[%s1309 + $0xf2] sm:$0xff]
        %v1717 = vld [vmem:[%s1309 + $0xfa] sm:$0xff]
        %v1718 = vld [vmem:[%s1309 + $0x10a] sm:$0xff]
        %v1719 = vld [vmem:[%s1309 + $0x112] sm:$0xff]
        %v1720 = vld [vmem:[%s1309 + $0x122] sm:$0xff]
        %v1721 = vld [vmem:[%s1309 + $0x12a] sm:$0xff]
        %v1722 = vld [vmem:[%s1309 + $0x13a] sm:$0xff]
        %v1723 = vld [vmem:[%s1309 + $0x142] sm:$0xff]
        %v1724 = vld [vmem:[%s1309 + $0x152] sm:$0xff]
        %v1725 = vld [vmem:[%s1309 + $0x15a] sm:$0xff]
        %v1726 = vld [vmem:[%s1309 + $0x16a] sm:$0xff]
        %v1727 = vld [vmem:[%s1309 + $0x172] sm:$0xff]
        %1760 = vrot.lane.b32.xlu0 %v1696, 32
        %v1761 = vpop.permute.xlu0 %1760
        %1762 = vrot.lane.b32.xlu0 %v1697, 32
        %v1763 = vpop.permute.xlu0 %1762
        %1764 = vrot.lane.b32.xlu0 %v1698, 32
        %v1765 = vpop.permute.xlu0 %1764
        %1766 = vrot.lane.b32.xlu0 %v1699, 32
        %v1767 = vpop.permute.xlu0 %1766
        %1768 = vrot.lane.b32.xlu0 %v1700, 32
        %v1769 = vpop.permute.xlu0 %1768
        %1770 = vrot.lane.b32.xlu0 %v1701, 32
        %v1771 = vpop.permute.xlu0 %1770
        %1772 = vrot.lane.b32.xlu0 %v1702, 32
        %v1773 = vpop.permute.xlu0 %1772
        %1774 = vrot.lane.b32.xlu0 %v1703, 32
        %v1775 = vpop.permute.xlu0 %1774
        %1776 = vrot.lane.b32.xlu0 %v1704, 32
        %v1777 = vpop.permute.xlu0 %1776
        %1778 = vrot.lane.b32.xlu0 %v1705, 32
        %v1779 = vpop.permute.xlu0 %1778
        %1780 = vrot.lane.b32.xlu0 %v1706, 32
        %v1781 = vpop.permute.xlu0 %1780
        %1782 = vrot.lane.b32.xlu0 %v1707, 32
        %v1783 = vpop.permute.xlu0 %1782
        %1784 = vrot.lane.b32.xlu0 %v1708, 32
        %v1785 = vpop.permute.xlu0 %1784
        %1786 = vrot.lane.b32.xlu0 %v1709, 32
        %v1787 = vpop.permute.xlu0 %1786
        %1788 = vrot.lane.b32.xlu0 %v1710, 32
        %v1789 = vpop.permute.xlu0 %1788
        %1790 = vrot.lane.b32.xlu0 %v1711, 32
        %v1791 = vpop.permute.xlu0 %1790
        %1792 = vrot.lane.b32.xlu0 %v1712, 32
        %v1793 = vpop.permute.xlu0 %1792
        %1794 = vrot.lane.b32.xlu0 %v1713, 32
        %v1795 = vpop.permute.xlu0 %1794
        %1796 = vrot.lane.b32.xlu0 %v1714, 32
        %v1797 = vpop.permute.xlu0 %1796
        %1798 = vrot.lane.b32.xlu0 %v1715, 32
        %v1799 = vpop.permute.xlu0 %1798
        %1800 = vrot.lane.b32.xlu0 %v1716, 32
        %v1801 = vpop.permute.xlu0 %1800
        %1802 = vrot.lane.b32.xlu0 %v1717, 32
        %v1803 = vpop.permute.xlu0 %1802
        %1804 = vrot.lane.b32.xlu0 %v1718, 32
        %v1805 = vpop.permute.xlu0 %1804
        %1806 = vrot.lane.b32.xlu0 %v1719, 32
        %v1807 = vpop.permute.xlu0 %1806
        %1808 = vrot.lane.b32.xlu0 %v1720, 32
        %v1809 = vpop.permute.xlu0 %1808
        %1810 = vrot.lane.b32.xlu0 %v1721, 32
        %v1811 = vpop.permute.xlu0 %1810
        %1812 = vrot.lane.b32.xlu0 %v1722, 32
        %v1813 = vpop.permute.xlu0 %1812
        %1814 = vrot.lane.b32.xlu0 %v1723, 32
        %v1815 = vpop.permute.xlu0 %1814
        %1816 = vrot.lane.b32.xlu0 %v1724, 32
        %v1817 = vpop.permute.xlu0 %1816
        %1818 = vrot.lane.b32.xlu0 %v1725, 32
        %v1819 = vpop.permute.xlu0 %1818
        %1820 = vrot.lane.b32.xlu0 %v1726, 32
        %v1821 = vpop.permute.xlu0 %1820
        %1822 = vrot.lane.b32.xlu0 %v1727, 32
        %v1823 = vpop.permute.xlu0 %1822
        %vm1856 = vcmask 294144
        %1857 = vst.msk [vmem:[#allocation3] sm:$0xff] %vm1856, %v1761
        %1858 = vst.msk [vmem:[#allocation3 + $0x8] sm:$0xff] %vm1856, %v1763
        %1859 = vst.msk [vmem:[#allocation3 + $0x10] sm:$0xff] %vm1856, %v1765
        %1860 = vst.msk [vmem:[#allocation3 + $0x18] sm:$0xff] %vm1856, %v1767
        %1861 = vst.msk [vmem:[#allocation3 + $0x20] sm:$0xff] %vm1856, %v1769
        %1862 = vst.msk [vmem:[#allocation3 + $0x28] sm:$0xff] %vm1856, %v1771
        %1863 = vst.msk [vmem:[#allocation3 + $0x30] sm:$0xff] %vm1856, %v1773
        %1864 = vst.msk [vmem:[#allocation3 + $0x38] sm:$0xff] %vm1856, %v1775
        %1865 = vst.msk [vmem:[#allocation3 + $0x40] sm:$0xff] %vm1856, %v1777
        %1866 = vst.msk [vmem:[#allocation3 + $0x48] sm:$0xff] %vm1856, %v1779
        %1867 = vst.msk [vmem:[#allocation3 + $0x50] sm:$0xff] %vm1856, %v1781
        %1868 = vst.msk [vmem:[#allocation3 + $0x58] sm:$0xff] %vm1856, %v1783
        %1869 = vst.msk [vmem:[#allocation3 + $0x60] sm:$0xff] %vm1856, %v1785
        %1870 = vst.msk [vmem:[#allocation3 + $0x68] sm:$0xff] %vm1856, %v1787
        %1871 = vst.msk [vmem:[#allocation3 + $0x70] sm:$0xff] %vm1856, %v1789
        %1872 = vst.msk [vmem:[#allocation3 + $0x78] sm:$0xff] %vm1856, %v1791
        %1873 = vst.msk [vmem:[#allocation3 + $0x80] sm:$0xff] %vm1856, %v1793
        %1874 = vst.msk [vmem:[#allocation3 + $0x88] sm:$0xff] %vm1856, %v1795
        %1875 = vst.msk [vmem:[#allocation3 + $0x90] sm:$0xff] %vm1856, %v1797
        %1876 = vst.msk [vmem:[#allocation3 + $0x98] sm:$0xff] %vm1856, %v1799
        %1877 = vst.msk [vmem:[#allocation3 + $0xa0] sm:$0xff] %vm1856, %v1801
        %1878 = vst.msk [vmem:[#allocation3 + $0xa8] sm:$0xff] %vm1856, %v1803
        %1879 = vst.msk [vmem:[#allocation3 + $0xb0] sm:$0xff] %vm1856, %v1805
        %1880 = vst.msk [vmem:[#allocation3 + $0xb8] sm:$0xff] %vm1856, %v1807
        %1881 = vst.msk [vmem:[#allocation3 + $0xc0] sm:$0xff] %vm1856, %v1809
        %1882 = vst.msk [vmem:[#allocation3 + $0xc8] sm:$0xff] %vm1856, %v1811
        %1883 = vst.msk [vmem:[#allocation3 + $0xd0] sm:$0xff] %vm1856, %v1813
        %1884 = vst.msk [vmem:[#allocation3 + $0xd8] sm:$0xff] %vm1856, %v1815
        %1885 = vst.msk [vmem:[#allocation3 + $0xe0] sm:$0xff] %vm1856, %v1817
        %1886 = vst.msk [vmem:[#allocation3 + $0xe8] sm:$0xff] %vm1856, %v1819
        %1887 = vst.msk [vmem:[#allocation3 + $0xf0] sm:$0xff] %vm1856, %v1821
        %1888 = vst.msk [vmem:[#allocation3 + $0xf8] sm:$0xff] %vm1856, %v1823
        %v1889 = vld [vmem:[#allocation3] sm:$0xff]
        %v1890 = vld [vmem:[#allocation3 + $0x8] sm:$0xff]
        %v1891 = vld [vmem:[#allocation3 + $0x10] sm:$0xff]
        %v1892 = vld [vmem:[#allocation3 + $0x18] sm:$0xff]
        %v1893 = vld [vmem:[#allocation3 + $0x20] sm:$0xff]
        %v1894 = vld [vmem:[#allocation3 + $0x28] sm:$0xff]
        %v1895 = vld [vmem:[#allocation3 + $0x30] sm:$0xff]
        %v1896 = vld [vmem:[#allocation3 + $0x38] sm:$0xff]
        %v1897 = vld [vmem:[#allocation3 + $0x40] sm:$0xff]
        %v1898 = vld [vmem:[#allocation3 + $0x48] sm:$0xff]
        %v1899 = vld [vmem:[#allocation3 + $0x50] sm:$0xff]
        %v1900 = vld [vmem:[#allocation3 + $0x58] sm:$0xff]
        %v1901 = vld [vmem:[#allocation3 + $0x60] sm:$0xff]
        %v1902 = vld [vmem:[#allocation3 + $0x68] sm:$0xff]
        %v1903 = vld [vmem:[#allocation3 + $0x70] sm:$0xff]
        %v1904 = vld [vmem:[#allocation3 + $0x78] sm:$0xff]
        %v1905 = vld [vmem:[#allocation3 + $0x80] sm:$0xff]
        %v1906 = vld [vmem:[#allocation3 + $0x88] sm:$0xff]
        %v1907 = vld [vmem:[#allocation3 + $0x90] sm:$0xff]
        %v1908 = vld [vmem:[#allocation3 + $0x98] sm:$0xff]
        %v1909 = vld [vmem:[#allocation3 + $0xa0] sm:$0xff]
        %v1910 = vld [vmem:[#allocation3 + $0xa8] sm:$0xff]
        %v1911 = vld [vmem:[#allocation3 + $0xb0] sm:$0xff]
        %v1912 = vld [vmem:[#allocation3 + $0xb8] sm:$0xff]
        %v1913 = vld [vmem:[#allocation3 + $0xc0] sm:$0xff]
        %v1914 = vld [vmem:[#allocation3 + $0xc8] sm:$0xff]
        %v1915 = vld [vmem:[#allocation3 + $0xd0] sm:$0xff]
        %v1916 = vld [vmem:[#allocation3 + $0xd8] sm:$0xff]
        %v1917 = vld [vmem:[#allocation3 + $0xe0] sm:$0xff]
        %v1918 = vld [vmem:[#allocation3 + $0xe8] sm:$0xff]
        %v1919 = vld [vmem:[#allocation3 + $0xf0] sm:$0xff]
        %v1920 = vld [vmem:[#allocation3 + $0xf8] sm:$0xff]
        %v1921 = vld [vmem:[%s1] sm:$0xff]
        %v1922 = vld [vmem:[%s1 + $0x8] sm:$0xff]
        %v1923 = vld [vmem:[%s1 + $0x10] sm:$0xff]
        %v1924 = vld [vmem:[%s1 + $0x18] sm:$0xff]
        %v1925 = vld [vmem:[%s1 + $0x20] sm:$0xf]
        %v1926 = vld [vmem:[%s2] sm:$0x1]
        %v1928 = vlaneseq
        %v1929 = vshrl.u32 %v1928, 7
        %v1930 = vsub.s32 0, %v1929
        %v1931 = vrot.slane %v1926, %v1930
        %vm1933 = vcmask 293888
        %v1935 = vsel %vm1933, %v1889, 0
        %v1938 = vsel %vm1933, %v1890, 0
        %v1941 = vsel %vm1933, %v1891, 0
        %v1944 = vsel %vm1933, %v1892, 0
        %v1947 = vsel %vm1933, %v1893, 0
        %v1950 = vsel %vm1933, %v1894, 0
        %v1953 = vsel %vm1933, %v1895, 0
        %v1956 = vsel %vm1933, %v1896, 0
        %v1959 = vsel %vm1933, %v1897, 0
        %v1962 = vsel %vm1933, %v1898, 0
        %v1965 = vsel %vm1933, %v1899, 0
        %v1968 = vsel %vm1933, %v1900, 0
        %v1971 = vsel %vm1933, %v1901, 0
        %v1974 = vsel %vm1933, %v1902, 0
        %v1977 = vsel %vm1933, %v1903, 0
        %v1980 = vsel %vm1933, %v1904, 0
        %v1983 = vsel %vm1933, %v1905, 0
        %v1986 = vsel %vm1933, %v1906, 0
        %v1989 = vsel %vm1933, %v1907, 0
        %v1992 = vsel %vm1933, %v1908, 0
        %v1995 = vsel %vm1933, %v1909, 0
        %v1998 = vsel %vm1933, %v1910, 0
        %v2001 = vsel %vm1933, %v1911, 0
        %v2004 = vsel %vm1933, %v1912, 0
        %v2007 = vsel %vm1933, %v1913, 0
        %v2010 = vsel %vm1933, %v1914, 0
        %v2013 = vsel %vm1933, %v1915, 0
        %v2016 = vsel %vm1933, %v1916, 0
        %v2019 = vsel %vm1933, %v1917, 0
        %v2022 = vsel %vm1933, %v1918, 0
        %v2025 = vsel %vm1933, %v1919, 0
        %v2028 = vsel %vm1933, %v1920, 0
        %vm2030 = vcmask 1043456
        %v2032 = vsel %vm2030, %v1925, 0
        %2034 = vmatprep.subr.mxu0 0.0
        %2035 = vmatpush1.msra.mxu0 %v1921
        %2036 = vmatprep.subr.mxu0 0.0
        %2037 = vmatpush1.msra.mxu0 %v1922
        %2038 = vmatprep.subr.mxu0 0.0
        %2039 = vmatpush1.msra.mxu0 %v1923
        %2040 = vmatprep.subr.mxu0 0.0
        %2041 = vmatpush1.msra.mxu0 %v1924
        %2042 = vmatprep.subr.mxu0 0.0
        %2043 = vmatpush1.msra.mxu0 %v2032
        %2044 = vmatprep.subr.mxu0 0.0
        %2045 = vmatpush1.msra.mxu0 0.0
        %2046 = vmatprep.subr.mxu0 0.0
        %2047 = vmatpush1.msra.mxu0 0.0
        %2048 = vmatprep.subr.mxu0 0.0
        %2049 = vmatpush1.msra.mxu0 0.0
        %2050 = vmatprep.subr.mxu0 0.0
        %2051 = vmatpush1.msra.mxu0 0.0
        %2052 = vmatprep.subr.mxu0 0.0
        %2053 = vmatpush1.msra.mxu0 0.0
        %2054 = vmatprep.subr.mxu0 0.0
        %2055 = vmatpush1.msra.mxu0 0.0
        %2056 = vmatprep.subr.mxu0 0.0
        %2057 = vmatpush1.msra.mxu0 0.0
        %2058 = vmatprep.subr.mxu0 0.0
        %2059 = vmatpush1.msra.mxu0 0.0
        %2060 = vmatprep.subr.mxu0 0.0
        %2061 = vmatpush1.msra.mxu0 0.0
        %2062 = vmatprep.subr.mxu0 0.0
        %2063 = vmatpush1.msra.mxu0 0.0
        %2064 = vmatprep.subr.mxu0 0.0
        %2065 = vmatpush1.msra.mxu0 0.0
        %2066 = vmatprep.subr.mxu0 0.0
        %2067 = vmatpush1.msra.mxu0 0.0
        %2068 = vmatprep.subr.mxu0 0.0
        %2069 = vmatpush1.msra.mxu0 0.0
        %2070 = vmatprep.subr.mxu0 0.0
        %2071 = vmatpush1.msra.mxu0 0.0
        %2072 = vmatprep.subr.mxu0 0.0
        %2073 = vmatpush1.msra.mxu0 0.0
        %2074 = vmatprep.subr.mxu0 0.0
        %2075 = vmatpush1.msra.mxu0 0.0
        %2076 = vmatprep.subr.mxu0 0.0
        %2077 = vmatpush1.msra.mxu0 0.0
        %2078 = vmatprep.subr.mxu0 0.0
        %2079 = vmatpush1.msra.mxu0 0.0
        %2080 = vmatprep.subr.mxu0 0.0
        %2081 = vmatpush1.msra.mxu0 0.0
        %2082 = vmatprep.subr.mxu0 0.0
        %2083 = vmatpush1.msra.mxu0 0.0
        %2084 = vmatprep.subr.mxu0 0.0
        %2085 = vmatpush1.msra.mxu0 0.0
        %2086 = vmatprep.subr.mxu0 0.0
        %2087 = vmatpush1.msra.mxu0 0.0
        %2088 = vmatprep.subr.mxu0 0.0
        %2089 = vmatpush1.msra.mxu0 0.0
        %2090 = vmatprep.subr.mxu0 0.0
        %2091 = vmatpush1.msra.mxu0 0.0
        %2092 = vmatprep.subr.mxu0 0.0
        %2093 = vmatpush1.msra.mxu0 0.0
        %2094 = vmatprep.subr.mxu0 0.0
        %2095 = vmatpush1.msra.mxu0 0.0
        %2096 = vmatprep.subr.mxu0 0.0
        %2097 = vmatpush1.msra.mxu0 0.0
        %2098 = vmatprep.mubr.f32.mxu0 0.0
        %2099 = vmatmul.mubr.f32.gmra.mrb[0].mxu0 %v1935
        %v2100 = vpop.f32.mrb[0].mxu0
        %v2101 = vadd.f32 %v1931, %v2100
        %v2102 = vpop.f32.mrb[0].mxu0
        %2103 = vmatprep.mubr.f32.mxu0 0.0
        %2104 = vmatmul.mubr.f32.gmra.mrb[0].mxu0 %v1938
        %v2105 = vpop.f32.mrb[0].mxu0
        %v2106 = vadd.f32 %v1931, %v2105
        %v2107 = vpop.f32.mrb[0].mxu0
        %2108 = vmatprep.mubr.f32.mxu0 0.0
        %2109 = vmatmul.mubr.f32.gmra.mrb[0].mxu0 %v1941
        %v2110 = vpop.f32.mrb[0].mxu0
        %v2111 = vadd.f32 %v1931, %v2110
        %v2112 = vpop.f32.mrb[0].mxu0
        %2113 = vmatprep.mubr.f32.mxu0 0.0
        %2114 = vmatmul.mubr.f32.gmra.mrb[0].mxu0 %v1944
        %v2115 = vpop.f32.mrb[0].mxu0
        %v2116 = vadd.f32 %v1931, %v2115
        %v2117 = vpop.f32.mrb[0].mxu0
        %2118 = vmatprep.mubr.f32.mxu0 0.0
        %2119 = vmatmul.mubr.f32.gmra.mrb[0].mxu0 %v1947
        %v2120 = vpop.f32.mrb[0].mxu0
        %v2121 = vadd.f32 %v1931, %v2120
        %v2122 = vpop.f32.mrb[0].mxu0
        %2123 = vmatprep.mubr.f32.mxu0 0.0
        %2124 = vmatmul.mubr.f32.gmra.mrb[0].mxu0 %v1950
        %v2125 = vpop.f32.mrb[0].mxu0
        %v2126 = vadd.f32 %v1931, %v2125
        %v2127 = vpop.f32.mrb[0].mxu0
        %2128 = vmatprep.mubr.f32.mxu0 0.0
        %2129 = vmatmul.mubr.f32.gmra.mrb[0].mxu0 %v1953
        %v2130 = vpop.f32.mrb[0].mxu0
        %v2131 = vadd.f32 %v1931, %v2130
        %v2132 = vpop.f32.mrb[0].mxu0
        %2133 = vmatprep.mubr.f32.mxu0 0.0
        %2134 = vmatmul.mubr.f32.gmra.mrb[0].mxu0 %v1956
        %v2135 = vpop.f32.mrb[0].mxu0
        %v2136 = vadd.f32 %v1931, %v2135
        %v2137 = vpop.f32.mrb[0].mxu0
        %2138 = vmatprep.mubr.f32.mxu0 0.0
        %2139 = vmatmul.mubr.f32.gmra.mrb[0].mxu0 %v1959
        %v2140 = vpop.f32.mrb[0].mxu0
        %v2141 = vadd.f32 %v1931, %v2140
        %v2142 = vpop.f32.mrb[0].mxu0
        %2143 = vmatprep.mubr.f32.mxu0 0.0
        %2144 = vmatmul.mubr.f32.gmra.mrb[0].mxu0 %v1962
        %v2145 = vpop.f32.mrb[0].mxu0
        %v2146 = vadd.f32 %v1931, %v2145
        %v2147 = vpop.f32.mrb[0].mxu0
        %2148 = vmatprep.mubr.f32.mxu0 0.0
        %2149 = vmatmul.mubr.f32.gmra.mrb[0].mxu0 %v1965
        %v2150 = vpop.f32.mrb[0].mxu0
        %v2151 = vadd.f32 %v1931, %v2150
        %v2152 = vpop.f32.mrb[0].mxu0
        %2153 = vmatprep.mubr.f32.mxu0 0.0
        %2154 = vmatmul.mubr.f32.gmra.mrb[0].mxu0 %v1968
        %v2155 = vpop.f32.mrb[0].mxu0
        %v2156 = vadd.f32 %v1931, %v2155
        %v2157 = vpop.f32.mrb[0].mxu0
        %2158 = vmatprep.mubr.f32.mxu0 0.0
        %2159 = vmatmul.mubr.f32.gmra.mrb[0].mxu0 %v1971
        %v2160 = vpop.f32.mrb[0].mxu0
        %v2161 = vadd.f32 %v1931, %v2160
        %v2162 = vpop.f32.mrb[0].mxu0
        %2163 = vmatprep.mubr.f32.mxu0 0.0
        %2164 = vmatmul.mubr.f32.gmra.mrb[0].mxu0 %v1974
        %v2165 = vpop.f32.mrb[0].mxu0
        %v2166 = vadd.f32 %v1931, %v2165
        %v2167 = vpop.f32.mrb[0].mxu0
        %2168 = vmatprep.mubr.f32.mxu0 0.0
        %2169 = vmatmul.mubr.f32.gmra.mrb[0].mxu0 %v1977
        %v2170 = vpop.f32.mrb[0].mxu0
        %v2171 = vadd.f32 %v1931, %v2170
        %v2172 = vpop.f32.mrb[0].mxu0
        %2173 = vmatprep.mubr.f32.mxu0 0.0
        %2174 = vmatmul.mubr.f32.gmra.mrb[0].mxu0 %v1980
        %v2175 = vpop.f32.mrb[0].mxu0
        %v2176 = vadd.f32 %v1931, %v2175
        %v2177 = vpop.f32.mrb[0].mxu0
        %2178 = vmatprep.mubr.f32.mxu0 0.0
        %2179 = vmatmul.mubr.f32.gmra.mrb[0].mxu0 %v1983
        %v2180 = vpop.f32.mrb[0].mxu0
        %v2181 = vadd.f32 %v1931, %v2180
        %v2182 = vpop.f32.mrb[0].mxu0
        %2183 = vmatprep.mubr.f32.mxu0 0.0
        %2184 = vmatmul.mubr.f32.gmra.mrb[0].mxu0 %v1986
        %v2185 = vpop.f32.mrb[0].mxu0
        %v2186 = vadd.f32 %v1931, %v2185
        %v2187 = vpop.f32.mrb[0].mxu0
        %2188 = vmatprep.mubr.f32.mxu0 0.0
        %2189 = vmatmul.mubr.f32.gmra.mrb[0].mxu0 %v1989
        %v2190 = vpop.f32.mrb[0].mxu0
        %v2191 = vadd.f32 %v1931, %v2190
        %v2192 = vpop.f32.mrb[0].mxu0
        %2193 = vmatprep.mubr.f32.mxu0 0.0
        %2194 = vmatmul.mubr.f32.gmra.mrb[0].mxu0 %v1992
        %v2195 = vpop.f32.mrb[0].mxu0
        %v2196 = vadd.f32 %v1931, %v2195
        %v2197 = vpop.f32.mrb[0].mxu0
        %2198 = vmatprep.mubr.f32.mxu0 0.0
        %2199 = vmatmul.mubr.f32.gmra.mrb[0].mxu0 %v1995
        %v2200 = vpop.f32.mrb[0].mxu0
        %v2201 = vadd.f32 %v1931, %v2200
        %v2202 = vpop.f32.mrb[0].mxu0
        %2203 = vmatprep.mubr.f32.mxu0 0.0
        %2204 = vmatmul.mubr.f32.gmra.mrb[0].mxu0 %v1998
        %v2205 = vpop.f32.mrb[0].mxu0
        %v2206 = vadd.f32 %v1931, %v2205
        %v2207 = vpop.f32.mrb[0].mxu0
        %2208 = vmatprep.mubr.f32.mxu0 0.0
        %2209 = vmatmul.mubr.f32.gmra.mrb[0].mxu0 %v2001
        %v2210 = vpop.f32.mrb[0].mxu0
        %v2211 = vadd.f32 %v1931, %v2210
        %v2212 = vpop.f32.mrb[0].mxu0
        %2213 = vmatprep.mubr.f32.mxu0 0.0
        %2214 = vmatmul.mubr.f32.gmra.mrb[0].mxu0 %v2004
        %v2215 = vpop.f32.mrb[0].mxu0
        %v2216 = vadd.f32 %v1931, %v2215
        %v2217 = vpop.f32.mrb[0].mxu0
        %2218 = vmatprep.mubr.f32.mxu0 0.0
        %2219 = vmatmul.mubr.f32.gmra.mrb[0].mxu0 %v2007
        %v2220 = vpop.f32.mrb[0].mxu0
        %v2221 = vadd.f32 %v1931, %v2220
        %v2222 = vpop.f32.mrb[0].mxu0
        %2223 = vmatprep.mubr.f32.mxu0 0.0
        %2224 = vmatmul.mubr.f32.gmra.mrb[0].mxu0 %v2010
        %v2225 = vpop.f32.mrb[0].mxu0
        %v2226 = vadd.f32 %v1931, %v2225
        %v2227 = vpop.f32.mrb[0].mxu0
        %2228 = vmatprep.mubr.f32.mxu0 0.0
        %2229 = vmatmul.mubr.f32.gmra.mrb[0].mxu0 %v2013
        %v2230 = vpop.f32.mrb[0].mxu0
        %v2231 = vadd.f32 %v1931, %v2230
        %v2232 = vpop.f32.mrb[0].mxu0
        %2233 = vmatprep.mubr.f32.mxu0 0.0
        %2234 = vmatmul.mubr.f32.gmra.mrb[0].mxu0 %v2016
        %v2235 = vpop.f32.mrb[0].mxu0
        %v2236 = vadd.f32 %v1931, %v2235
        %v2237 = vpop.f32.mrb[0].mxu0
        %2238 = vmatprep.mubr.f32.mxu0 0.0
        %2239 = vmatmul.mubr.f32.gmra.mrb[0].mxu0 %v2019
        %v2240 = vpop.f32.mrb[0].mxu0
        %v2241 = vadd.f32 %v1931, %v2240
        %v2242 = vpop.f32.mrb[0].mxu0
        %2243 = vmatprep.mubr.f32.mxu0 0.0
        %2244 = vmatmul.mubr.f32.gmra.mrb[0].mxu0 %v2022
        %v2245 = vpop.f32.mrb[0].mxu0
        %v2246 = vadd.f32 %v1931, %v2245
        %v2247 = vpop.f32.mrb[0].mxu0
        %2248 = vmatprep.mubr.f32.mxu0 0.0
        %2249 = vmatmul.mubr.f32.gmra.mrb[0].mxu0 %v2025
        %v2250 = vpop.f32.mrb[0].mxu0
        %v2251 = vadd.f32 %v1931, %v2250
        %v2252 = vpop.f32.mrb[0].mxu0
        %2253 = vmatprep.mubr.f32.mxu0 0.0
        %2254 = vmatmul.mubr.f32.gmra.mrb[0].mxu0 %v2028
        %v2255 = vpop.f32.mrb[0].mxu0
        %v2256 = vadd.f32 %v1931, %v2255
        %v2257 = vpop.f32.mrb[0].mxu0
        %2258 = vdwg.mxu0
        %2259 = vxpose.xlu0.b32.start [1/16] %v2101, 128
        %2260 = vxpose.xlu0.b32.cont [2/16] %v2106, 128
        %2261 = vxpose.xlu0.b32.cont [3/16] %v2111, 128
        %2262 = vxpose.xlu0.b32.cont [4/16] %v2116, 128
        %2263 = vxpose.xlu0.b32.cont [5/16] %v2121, 128
        %2264 = vxpose.xlu0.b32.cont [6/16] %v2126, 128
        %2265 = vxpose.xlu0.b32.cont [7/16] %v2131, 128
        %2266 = vxpose.xlu0.b32.cont [8/16] %v2136, 128
        %2267 = vxpose.xlu0.b32.cont [9/16] %v2141, 128
        %2268 = vxpose.xlu0.b32.cont [10/16] %v2146, 128
        %2269 = vxpose.xlu0.b32.cont [11/16] %v2151, 128
        %2270 = vxpose.xlu0.b32.cont [12/16] %v2156, 128
        %2271 = vxpose.xlu0.b32.cont [13/16] %v2161, 128
        %2272 = vxpose.xlu0.b32.cont [14/16] %v2166, 128
        %2273 = vxpose.xlu0.b32.cont [15/16] %v2171, 128
        %2274 = vxpose.xlu0.b32.end [16/16] %v2176, 128
        %v2275 = vpop.trf.xlu0
        %v2276 = vpop.trf.xlu0
        %v2277 = vpop.trf.xlu0
        %v2278 = vpop.trf.xlu0
        %v2279 = vpop.trf.xlu0
        %v2280 = vpop.trf.xlu0
        %v2281 = vpop.trf.xlu0
        %v2282 = vpop.trf.xlu0
        %v2283 = vpop.trf.xlu0
        %v2284 = vpop.trf.xlu0
        %v2285 = vpop.trf.xlu0
        %v2286 = vpop.trf.xlu0
        %v2287 = vpop.trf.xlu0
        %v2288 = vpop.trf.xlu0
        %v2289 = vpop.trf.xlu0
        %v2290 = vpop.trf.xlu0
        %2291 = vxpose.xlu0.b32.start [1/16] %v2181, 128
        %2292 = vxpose.xlu0.b32.cont [2/16] %v2186, 128
        %2293 = vxpose.xlu0.b32.cont [3/16] %v2191, 128
        %2294 = vxpose.xlu0.b32.cont [4/16] %v2196, 128
        %2295 = vxpose.xlu0.b32.cont [5/16] %v2201, 128
        %2296 = vxpose.xlu0.b32.cont [6/16] %v2206, 128
        %2297 = vxpose.xlu0.b32.cont [7/16] %v2211, 128
        %2298 = vxpose.xlu0.b32.cont [8/16] %v2216, 128
        %2299 = vxpose.xlu0.b32.cont [9/16] %v2221, 128
        %2300 = vxpose.xlu0.b32.cont [10/16] %v2226, 128
        %2301 = vxpose.xlu0.b32.cont [11/16] %v2231, 128
        %2302 = vxpose.xlu0.b32.cont [12/16] %v2236, 128
        %2303 = vxpose.xlu0.b32.cont [13/16] %v2241, 128
        %2304 = vxpose.xlu0.b32.cont [14/16] %v2246, 128
        %2305 = vxpose.xlu0.b32.cont [15/16] %v2251, 128
        %2306 = vxpose.xlu0.b32.end [16/16] %v2256, 128
        %v2307 = vpop.trf.xlu0
        %v2308 = vpop.trf.xlu0
        %v2309 = vpop.trf.xlu0
        %v2310 = vpop.trf.xlu0
        %v2311 = vpop.trf.xlu0
        %v2312 = vpop.trf.xlu0
        %v2313 = vpop.trf.xlu0
        %v2314 = vpop.trf.xlu0
        %v2315 = vpop.trf.xlu0
        %v2316 = vpop.trf.xlu0
        %v2317 = vpop.trf.xlu0
        %v2318 = vpop.trf.xlu0
        %v2319 = vpop.trf.xlu0
        %v2320 = vpop.trf.xlu0
        %v2321 = vpop.trf.xlu0
        %v2322 = vpop.trf.xlu0
        %2323 = vst [vmem:[%s163] sm:$0xff] %v2275
        %2324 = vst [vmem:[%s163 + $0x8] sm:$0xff] %v2307
        %s2325 = sand.u32 %s93, 1
        %s2326 = scalar_lea.sflag [#allocation5], %s2325
        %s2327 = sand.u32 %s93, 1
        %s2328 = smul.addr %s2327, 16
        %s2329 = scalar_lea.vmem [#allocation4], %s2328
        // Predicated region
        $region33: #{tpu_custom_call.1} parent=31 // pred_check
          %p2330 = pneg %p103
        $region34: #{tpu_custom_call.1} parent=31 // pred_check_branch
          %2332 = sbr.rel (%p2330) target = $region36
        $region35: #{tpu_custom_call.1} parent=31 // pred_region
          %s2334 = ssub.s32 256, 256
          %2335 = vsyncadd %s2326, %s2334
          %s2336 = smul.addr %s17, 2
          %s2337 = smul.addr %s2336, 128
          %s2338 = scalar_lea.hbm %s3, %s2337
          %s2340 = sshll.u32 %s2329, 4
          %s2341 = int_to_ptr.vmem [resolvable:$true] %s2340
          %2343 = dma.vmem_to_hbm [thread:$0]  %s2341, 256, %s2338, %s2326
        $region36: #{tpu_custom_call.1} parent=31 // pred_fallthru
          _
      $region32: #{tpu_custom_call.1} parent=5 // pred_fallthru
        _
      %p2344 = scmp.le.s32.totalorder 2, %s12
      // Predicated region
      $region37: #{tpu_custom_call.1} parent=5 // pred_check
        %p2345 = pneg %p2344
      $region38: #{tpu_custom_call.1} parent=5 // pred_check_branch
        %2347 = sbr.rel (%p2345) target = $region40
      $region39: #{tpu_custom_call.1} parent=5 // pred_region
        %s2348 = ssub.s32 %s12, 2
        // Predicated region
        $region41: #{tpu_custom_call.1} parent=39 // pred_check
          %p2349 = pneg %p109
        $region42: #{tpu_custom_call.1} parent=39 // pred_check_branch
          %2351 = sbr.rel (%p2349) target = $region44
        $region43: #{tpu_custom_call.1} parent=39 // pred_region
          %s2352 = sand.u32 %s94, 1
          %s2353 = scalar_lea.sflag [#allocation5], %s2352
          %s2354 = sand.u32 %s94, 1
          %s2355 = smul.addr %s2354, 16
          %s2356 = scalar_lea.vmem [#allocation4], %s2355
          %2357 = dma.done %s2353, 256
        $region44: #{tpu_custom_call.1} parent=39 // pred_fallthru
          _
      $region40: #{tpu_custom_call.1} parent=5 // pred_fallthru
        _
    $region6: #{tpu_custom_call.1} parent=1 // loop_footer
      %s16 = sadd.s32 1, %s12
    $region7: #{tpu_custom_call.1} parent=1 // loop_footer_branch
      %11 = sbr.rel target = $region3
    $region8: #{tpu_custom_call.1} parent=1 // loop_exit
      _
    %2358 = vsyncpa [#allocation5], 1
    %s2359 = scalar_lea.sflag [#allocation5], 1
    %2360 = vsyncpa %s2359, 1

</llo_original>
